<compile_context>
chip_gen: v5e
topology: v5e:2x2
jax: 0.10.0
libtpu: 0.0.40
codegen_flags: <defaults>
</compile_context>

<pallas_src>
import functools

import jax
import jax.numpy as jnp
from jax.experimental import pallas as pl
from jax.experimental.pallas import tpu as pltpu


def _round_up(x, m):
    return (x + m - 1) // m * m


def _supcon_intra_kernel(temp_ref, anchor_ref, contrast_ref, laba_ref, labc_ref,
                         out_ref,
                         m_sc, ds_sc, dn_sc, ps_sc, ms_sc,
                         *, n_valid, n_padded, tm, tk):
    i = pl.program_id(0)          # anchor-row tile   (parallel)
    k = pl.program_id(1)          # contrast-col tile (arbitrary / reduction, last axis)

    @pl.when(k == 0)
    def _():
        m_sc[...] = jnp.full((tm, 1), -jnp.inf, jnp.float32)   # running row max
        ds_sc[...] = jnp.zeros((tm, 1), jnp.float32)           # sibling denom
        dn_sc[...] = jnp.zeros((tm, 1), jnp.float32)           # non-sibling denom
        ps_sc[...] = jnp.zeros((tm, 1), jnp.float32)           # sum(mask * s)
        ms_sc[...] = jnp.zeros((tm, 1), jnp.float32)           # mask_sum

    # Temperature folded into the small [tm, D] anchor operand (no [tm, tk] divide);
    # bf16 MXU operands with f32 accumulation.
    a = (anchor_ref[...].astype(jnp.float32) / temp_ref[0, 0]).astype(jnp.bfloat16)
    s = jax.lax.dot_general(a, contrast_ref[...], (((1,), (1,)), ((), ())),
                            preferred_element_type=jnp.float32)          # [tm, tk]

    # Broadcast [tm,1] / [1,tk] iotas instead of full-tile int32 iotas.
    rows = jax.lax.broadcasted_iota(jnp.int32, (tm, 1), 0) + i * tm
    cols = jax.lax.broadcasted_iota(jnp.int32, (1, tk), 1) + k * tk
    not_self = rows != cols                        # logits_mask: remove self-contrast
    if n_padded != n_valid:                        # static: only when padding exists
        # Padded columns: exp -> 0. Label compares are already False there because the
        # pad sentinel (-1) never equals a real (>= 0) label, so no extra AND is needed.
        s = jnp.where(cols < n_valid, s, -jnp.inf)

    # Online-softmax update (m is finite after k == 0: column 0 is always a real column).
    m_prev = m_sc[...]
    m_new = jnp.maximum(m_prev, jnp.max(s, axis=1, keepdims=True))
    scale = jnp.exp(m_prev - m_new)                # == 0 at k == 0 (m_prev = -inf)
    e = jnp.exp(s - m_new)
    e_od = jnp.where(not_self, e, 0.0)             # exact diagonal removal (no cancellation)

    fine_eq = laba_ref[:, 0:1] == labc_ref[0:1, :]     # [tm, tk]
    coarse_eq = laba_ref[:, 1:2] == labc_ref[1:2, :]   # [tm, tk]

    ds_sc[...] = scale * ds_sc[...] + jnp.sum(jnp.where(coarse_eq, e_od, 0.0),
                                              axis=1, keepdims=True)
    # Own masked sum (NOT total - sibling): avoids cancellation when the non-sibling
    # denominator is much smaller than the sibling one.
    dn_sc[...] = scale * dn_sc[...] + jnp.sum(jnp.where(coarse_eq, 0.0, e_od),
                                              axis=1, keepdims=True)

    pos = jnp.logical_and(fine_eq, not_self)       # positives: same fine label, not self
    ms_sc[...] += jnp.sum(jnp.where(pos, 1.0, 0.0), axis=1, keepdims=True)
    ps_sc[...] += jnp.sum(jnp.where(pos, s, 0.0), axis=1, keepdims=True)
    m_sc[...] = m_new

    @pl.when(k == pl.num_programs(1) - 1)
    def _():
        # Per-row loss:  0.6*log(d_s) + 0.4*log(d_n) + m_final - sum(mask*s)/mask_sum
        # == -(sum mask*(logits - log d))/mask_sum with logits = s - m_final, weighted.
        out_ref[...] = (0.6 * jnp.log(ds_sc[...]) + 0.4 * jnp.log(dn_sc[...])
                        + m_sc[...] - ps_sc[...] / ms_sc[...])


def supcon_loss_intra(temperature, features, label1, label2, label_c1, label_c2,
                      contrast_mode='all'):
    if features.ndim < 3:
        raise ValueError('`features` needs to be [bsz, n_views, ...]')
    bsz, n_views = features.shape[0], features.shape[1]
    feat = features.reshape(bsz, n_views, -1)
    if contrast_mode != 'all':
        # TODO(synk): contrast_mode='one' not implemented (module default path is 'all')
        raise ValueError('only contrast_mode="all" is implemented')

    # torch.cat(torch.unbind(features, dim=1), dim=0)
    contrast_feature = jnp.concatenate([feat[:, v, :] for v in range(n_views)], axis=0)
    N, D = contrast_feature.shape

    label = jnp.concatenate([jnp.ravel(label1), jnp.ravel(label2)], axis=0).astype(jnp.int32)
    label_c = jnp.concatenate([jnp.ravel(label_c1), jnp.ravel(label_c2)], axis=0).astype(jnp.int32)
    assert label.shape[0] == N, "label mask is [2*bsz, 2*bsz], so n_views must be 2"

    # ---- tiling --------------------------------------------------------------------
    # Pad the contrast axis to a multiple of 128 so row tile (tm) and column tile (tk)
    # both divide it. Padded columns contribute exp()=0; padded anchor rows are dropped
    # before the final mean.
    n_pad = _round_up(N, 128)
    # Column tile: live [tm,tk] f32 temporaries scale as O(tm*tk), independent of N.
    # (tk/tm below are sweep candidates on v6e's larger VMEM; re-derive before raising
    # them on v7x's 64 MiB.)
    tk = next(c for c in (512, 256, 128) if n_pad % c == 0)
    # Row tile: always >= 2 row tiles so dimension_semantics=("parallel", ...) can shard
    # anchors across v7x's two TensorCores even for small batches.
    tm = next(c for c in (256, 128, 64) if n_pad % c == 0 and n_pad // c >= 2)
    grid = (n_pad // tm, n_pad // tk)

    cf = contrast_feature.astype(jnp.bfloat16)     # bf16 MXU operands, f32 accumulation
    if n_pad != N:
        cf = jnp.pad(cf, ((0, n_pad - N), (0, 0)))
        label = jnp.pad(label, (0, n_pad - N), constant_values=-1)
        label_c = jnp.pad(label_c, (0, n_pad - N), constant_values=-1)

    lab_a = jnp.stack([label, label_c], axis=1)    # [n_pad, 2]  anchor-side labels
    lab_c2 = jnp.stack([label, label_c], axis=0)   # [2, n_pad]  contrast-side labels
    temp = jnp.asarray(temperature, jnp.float32).reshape(1, 1)

    kernel = functools.partial(_supcon_intra_kernel, n_valid=N, n_padded=n_pad,
                               tm=tm, tk=tk)
    per_row = pl.pallas_call(
        kernel,
        out_shape=jax.ShapeDtypeStruct((n_pad, 1), jnp.float32),
        grid=grid,
        in_specs=[
            pl.BlockSpec(memory_space=pltpu.MemorySpace.SMEM),   # temperature scalar
            pl.BlockSpec((tm, D), lambda i, k: (i, 0)),          # anchor rows (once per row tile)
            pl.BlockSpec((tk, D), lambda i, k: (k, 0)),          # contrast column tile
            pl.BlockSpec((tm, 2), lambda i, k: (i, 0)),          # anchor (fine, coarse) labels
            pl.BlockSpec((2, tk), lambda i, k: (0, k)),          # contrast (fine, coarse) labels
        ],
        out_specs=pl.BlockSpec((tm, 1), lambda i, k: (i, 0)),
        scratch_shapes=[pltpu.VMEM((tm, 1), jnp.float32)] * 5,   # m, d_s, d_n, pos_s, msum
        compiler_params=pltpu.CompilerParams(
            dimension_semantics=("parallel", "arbitrary"),
            # Actual use is a few MiB (O(tm*tk)); 32 MiB keeps headroom and is within
            # every generation's physical VMEM (explicit limit per the v5e review item).
            vmem_limit_bytes=32 * 1024 * 1024,
        ),
    )(temp, cf, cf, lab_a, lab_c2)

    # Final scalar reduction over the N real anchor rows (padded rows dropped).
    return jnp.mean(per_row[:N, 0])


def _reference(temperature, features, label1, label2, label_c1, label_c2, *,
               bf16_matmul=False):
    """Pure-JAX port of the torch module. bf16_matmul=True mirrors the kernel's
    intentional bf16-operand / f32-accumulate Gram matrix (isolates precision from
    the mask/log algebra)."""
    bsz, n_views = features.shape[0], features.shape[1]
    feat = features.reshape(bsz, n_views, -1)
    cf = jnp.concatenate([feat[:, v, :] for v in range(n_views)], axis=0).astype(jnp.float32)
    N = cf.shape[0]
    if bf16_matmul:
        t32 = jnp.asarray(temperature, jnp.float32)
        b = cf.astype(jnp.bfloat16)
        a = (b.astype(jnp.float32) / t32).astype(jnp.bfloat16)
        s = jnp.matmul(a.astype(jnp.float32), b.astype(jnp.float32).T,
                       precision=jax.lax.Precision.HIGHEST)
    else:
        s = jnp.matmul(cf, cf.T, precision=jax.lax.Precision.HIGHEST) / temperature
    label = jnp.concatenate([jnp.ravel(label1), jnp.ravel(label2)], 0)
    label_c = jnp.concatenate([jnp.ravel(label_c1), jnp.ravel(label_c2)], 0)
    mask = (label[:, None] == label[None, :]).astype(jnp.float32)
    mask_c = (label_c[:, None] == label_c[None, :]).astype(jnp.float32)
    logits = s - jnp.max(s, axis=1, keepdims=True)
    off = 1.0 - jnp.eye(N, dtype=jnp.float32)
    mask = mask * off
    mask_c_off = mask_c * off
    mask_ns = off - mask_c_off
    e = jnp.exp(logits)
    msum = mask.sum(1)
    lp_s = logits - jnp.log((e * mask_c_off).sum(1, keepdims=True))
    loss_s = jnp.mean(-(mask * lp_s).sum(1) / msum)
    lp_n = logits - jnp.log((e * mask_ns).sum(1, keepdims=True))
    loss_n = jnp.mean(-(mask * lp_n).sum(1) / msum)
    return 0.6 * loss_s + 0.4 * loss_n


if __name__ == "__main__":
    key = jax.random.PRNGKey(0)
    bsz, n_views, D = 8, 2, 32
    features = jax.random.normal(key, (bsz, n_views, D), jnp.float32)
    features = features / jnp.linalg.norm(features, axis=-1, keepdims=True)

    label1 = jnp.array([0, 0, 1, 1, 2, 2, 3, 3], jnp.int32)    # fine labels, view 0
    label2 = jnp.array([0, 0, 1, 1, 2, 2, 3, 3], jnp.int32)    # fine labels, view 1
    label_c1 = jnp.array([0, 0, 0, 0, 1, 1, 1, 1], jnp.int32)  # coarse labels, view 0
    label_c2 = jnp.array([0, 0, 0, 0, 1, 1, 1, 1], jnp.int32)  # coarse labels, view 1
    temperature = 0.1

    loss = supcon_loss_intra(temperature, features, label1, label2, label_c1, label_c2)
    loss = jax.block_until_ready(loss)

    # Tight check vs. a reference using the same bf16-operand Gram matrix (verifies the
    # mask / online-softmax / log-factoring algebra), plus a documented-tolerance check
    # vs. the full-f32 reference (bf16 input rounding budget at temperature=0.1).
    ref_matched = _reference(temperature, features, label1, label2, label_c1, label_c2,
                             bf16_matmul=True)
    ref_f32 = _reference(temperature, features, label1, label2, label_c1, label_c2,
                         bf16_matmul=False)

    assert jnp.isfinite(loss), "loss is not finite"
    assert jnp.allclose(loss, ref_matched, rtol=1e-3, atol=1e-3), (loss, ref_matched)
    assert jnp.allclose(loss, ref_f32, rtol=5e-2, atol=5e-2), (loss, ref_f32)
    print("KERNEL_OK")
</pallas_src>

<mosaic_0001>
module attributes {stable_mosaic.version = 11 : i64} {
  func.func @_supcon_intra_kernel(%arg0: i32, %arg1: i32, %arg2: memref<1x1xf32, #tpu.memory_space<smem>>, %arg3: memref<64x32xbf16, #tpu.memory_space<vmem>>, %arg4: memref<128x32xbf16, #tpu.memory_space<vmem>>, %arg5: memref<64x2xi32, #tpu.memory_space<vmem>>, %arg6: memref<2x128xi32, #tpu.memory_space<vmem>>, %arg7: memref<64x1xf32, #tpu.memory_space<vmem>>, %arg8: memref<64x1xf32, #tpu.memory_space<vmem>>, %arg9: memref<64x1xf32, #tpu.memory_space<vmem>>, %arg10: memref<64x1xf32, #tpu.memory_space<vmem>>, %arg11: memref<64x1xf32, #tpu.memory_space<vmem>>, %arg12: memref<64x1xf32, #tpu.memory_space<vmem>>) attributes {dimension_semantics = [#tpu.dimension_semantics<parallel>, #tpu.dimension_semantics<arbitrary>], iteration_bounds = array<i64: 2, 1>, scalar_prefetch = 0 : i64, scratch_operands = 5 : i64, tpu.core_type = #tpu.core_type<tc>, window_params = [{transform_indices = @transform_0, window_bounds = array<i64: 1, 1>}, {transform_indices = @transform_1, window_bounds = array<i64: 64, 32>}, {transform_indices = @transform_2, window_bounds = array<i64: 128, 32>}, {transform_indices = @transform_3, window_bounds = array<i64: 64, 2>}, {transform_indices = @transform_4, window_bounds = array<i64: 2, 128>}, {transform_indices = @transform_5, window_bounds = array<i64: 64, 1>}]} {
    %c0_i32 = arith.constant 0 : i32
    %0 = arith.cmpi eq, %arg1, %c0_i32 : i32
    %1 = arith.extui %0 : i1 to i32
    %c0_i32_0 = arith.constant 0 : i32
    %2 = arith.cmpi ne, %1, %c0_i32_0 : i32
    scf.if %2 {
      %cst_47 = arith.constant 0xFF800000 : f32
      %85 = vector.broadcast %cst_47 : f32 to vector<64x1xf32>
      %c0_48 = arith.constant 0 : index
      %c0_49 = arith.constant 0 : index
      %86 = vector.load %arg8[%c0_48, %c0_49] : memref<64x1xf32, #tpu.memory_space<vmem>>, vector<64x1xf32>
      tpu.vector_store %arg8[%c0_48, %c0_49], %85 {strides = array<i32>} : memref<64x1xf32, #tpu.memory_space<vmem>>, vector<64x1xf32>,
      %cst_50 = arith.constant 0.000000e+00 : f32
      %87 = vector.broadcast %cst_50 : f32 to vector<64x1xf32>
      %c0_51 = arith.constant 0 : index
      %c0_52 = arith.constant 0 : index
      %88 = vector.load %arg9[%c0_51, %c0_52] : memref<64x1xf32, #tpu.memory_space<vmem>>, vector<64x1xf32>
      tpu.vector_store %arg9[%c0_51, %c0_52], %87 {strides = array<i32>} : memref<64x1xf32, #tpu.memory_space<vmem>>, vector<64x1xf32>,
      %cst_53 = arith.constant 0.000000e+00 : f32
      %89 = vector.broadcast %cst_53 : f32 to vector<64x1xf32>
      %c0_54 = arith.constant 0 : index
      %c0_55 = arith.constant 0 : index
      %90 = vector.load %arg10[%c0_54, %c0_55] : memref<64x1xf32, #tpu.memory_space<vmem>>, vector<64x1xf32>
      tpu.vector_store %arg10[%c0_54, %c0_55], %89 {strides = array<i32>} : memref<64x1xf32, #tpu.memory_space<vmem>>, vector<64x1xf32>,
      %cst_56 = arith.constant 0.000000e+00 : f32
      %91 = vector.broadcast %cst_56 : f32 to vector<64x1xf32>
      %c0_57 = arith.constant 0 : index
      %c0_58 = arith.constant 0 : index
      %92 = vector.load %arg11[%c0_57, %c0_58] : memref<64x1xf32, #tpu.memory_space<vmem>>, vector<64x1xf32>
      tpu.vector_store %arg11[%c0_57, %c0_58], %91 {strides = array<i32>} : memref<64x1xf32, #tpu.memory_space<vmem>>, vector<64x1xf32>,
      %cst_59 = arith.constant 0.000000e+00 : f32
      %93 = vector.broadcast %cst_59 : f32 to vector<64x1xf32>
      %c0_60 = arith.constant 0 : index
      %c0_61 = arith.constant 0 : index
      %94 = vector.load %arg12[%c0_60, %c0_61] : memref<64x1xf32, #tpu.memory_space<vmem>>, vector<64x1xf32>
      tpu.vector_store %arg12[%c0_60, %c0_61], %93 {strides = array<i32>} : memref<64x1xf32, #tpu.memory_space<vmem>>, vector<64x1xf32>,
    } else {
    }
    %c0 = arith.constant 0 : index
    %c0_1 = arith.constant 0 : index
    %3 = vector.load %arg3[%c0, %c0_1] : memref<64x32xbf16, #tpu.memory_space<vmem>>, vector<64x32xbf16>
    %4 = arith.extf %3 : vector<64x32xbf16> to vector<64x32xf32>
    %c0_2 = arith.constant 0 : index
    %c0_3 = arith.constant 0 : index
    %5 = memref.load %arg2[%c0_2, %c0_3] : memref<1x1xf32, #tpu.memory_space<smem>>
    %6 = vector.broadcast %5 : f32 to vector<64x32xf32>
    %7 = arith.divf %4, %6 : vector<64x32xf32>
    %8 = arith.truncf %7 : vector<64x32xf32> to vector<64x32xbf16>
    %c0_4 = arith.constant 0 : index
    %c0_5 = arith.constant 0 : index
    %9 = vector.load %arg4[%c0_4, %c0_5] : memref<128x32xbf16, #tpu.memory_space<vmem>>, vector<128x32xbf16>
    %cst = arith.constant dense<0.000000e+00> : vector<64x128xf32>
    %10 = tpu.matmul %8, %9, %cst {dimension_numbers = #tpu.dot_dimension_numbers<[1], [1], [0], [0], [0, 0, 1, 0], [], []>} : vector<64x32xbf16>, vector<128x32xbf16>, vector<64x128xf32> -> vector<64x128xf32>
    %11 = tpu.iota {dimensions = array<i32: 0>} : vector<64x1xi32>
    %c64_i32 = arith.constant 64 : i32
    %12 = arith.muli %arg0, %c64_i32 : i32
    %13 = vector.broadcast %12 : i32 to vector<64x1xi32>
    %14 = arith.addi %11, %13 : vector<64x1xi32>
    %15 = tpu.iota {dimensions = array<i32: 1>} : vector<1x128xi32>
    %c128_i32 = arith.constant 128 : i32
    %16 = arith.muli %arg1, %c128_i32 : i32
    %17 = vector.broadcast %16 : i32 to vector<1x128xi32>
    %18 = arith.addi %15, %17 : vector<1x128xi32>
    %19 = vector.broadcast %14 : vector<64x1xi32> to vector<64x128xi32>
    %20 = vector.broadcast %18 : vector<1x128xi32> to vector<64x128xi32>
    %21 = arith.cmpi ne, %19, %20 : vector<64x128xi32>
    %c16_i32 = arith.constant 16 : i32
    %22 = vector.broadcast %c16_i32 : i32 to vector<1x128xi32>
    %23 = arith.cmpi slt, %18, %22 : vector<1x128xi32>
    %cst_6 = arith.constant 0xFF800000 : f32
    %24 = vector.shape_cast %23 : vector<1x128xi1> to vector<1x128xi1>
    %25 = vector.broadcast %24 : vector<1x128xi1> to vector<64x128xi1>
    %26 = vector.broadcast %cst_6 : f32 to vector<64x128xf32>
    %27 = arith.select %25, %10, %26 : vector<64x128xi1>, vector<64x128xf32>
    %c0_7 = arith.constant 0 : index
    %c0_8 = arith.constant 0 : index
    %28 = vector.load %arg8[%c0_7, %c0_8] : memref<64x1xf32, #tpu.memory_space<vmem>>, vector<64x1xf32>
    %cst_9 = arith.constant dense<0xFF800000> : vector<64xf32>
    %29 = vector.multi_reduction <maximumf>, %27, %cst_9 [1] : vector<64x128xf32> to vector<64xf32>
    %30 = vector.shape_cast %29 : vector<64xf32> to vector<64x1xf32>
    %31 = arith.maximumf %28, %30 : vector<64x1xf32>
    %32 = arith.subf %28, %31 : vector<64x1xf32>
    %33 = math.exp %32 : vector<64x1xf32>
    %34 = vector.broadcast %31 : vector<64x1xf32> to vector<64x128xf32>
    %35 = arith.subf %27, %34 : vector<64x128xf32>
    %36 = math.exp %35 : vector<64x128xf32>
    %cst_10 = arith.constant 0.000000e+00 : f32
    %37 = vector.broadcast %cst_10 : f32 to vector<64x128xf32>
    %38 = arith.select %21, %36, %37 : vector<64x128xi1>, vector<64x128xf32>
    %c0_11 = arith.constant 0 : index
    %c0_12 = arith.constant 0 : index
    %39 = vector.load %arg5[%c0_11, %c0_12] : memref<64x2xi32, #tpu.memory_space<vmem>>, vector<64x1xi32>
    %c0_13 = arith.constant 0 : index
    %c0_14 = arith.constant 0 : index
    %40 = vector.load %arg6[%c0_13, %c0_14] : memref<2x128xi32, #tpu.memory_space<vmem>>, vector<1x128xi32>
    %41 = vector.broadcast %39 : vector<64x1xi32> to vector<64x128xi32>
    %42 = vector.broadcast %40 : vector<1x128xi32> to vector<64x128xi32>
    %43 = arith.cmpi eq, %41, %42 : vector<64x128xi32>
    %c0_15 = arith.constant 0 : index
    %c1 = arith.constant 1 : index
    %44 = vector.load %arg5[%c0_15, %c1] : memref<64x2xi32, #tpu.memory_space<vmem>>, vector<64x1xi32>
    %c1_16 = arith.constant 1 : index
    %c0_17 = arith.constant 0 : index
    %45 = vector.load %arg6[%c1_16, %c0_17] : memref<2x128xi32, #tpu.memory_space<vmem>>, vector<1x128xi32>
    %46 = vector.broadcast %44 : vector<64x1xi32> to vector<64x128xi32>
    %47 = vector.broadcast %45 : vector<1x128xi32> to vector<64x128xi32>
    %48 = arith.cmpi eq, %46, %47 : vector<64x128xi32>
    %c0_18 = arith.constant 0 : index
    %c0_19 = arith.constant 0 : index
    %49 = vector.load %arg9[%c0_18, %c0_19] : memref<64x1xf32, #tpu.memory_space<vmem>>, vector<64x1xf32>
    %50 = arith.mulf %33, %49 : vector<64x1xf32>
    %cst_20 = arith.constant 0.000000e+00 : f32
    %51 = vector.broadcast %cst_20 : f32 to vector<64x128xf32>
    %52 = arith.select %48, %38, %51 : vector<64x128xi1>, vector<64x128xf32>
    %cst_21 = arith.constant dense<0.000000e+00> : vector<64xf32>
    %53 = vector.multi_reduction <add>, %52, %cst_21 [1] : vector<64x128xf32> to vector<64xf32>
    %54 = vector.shape_cast %53 : vector<64xf32> to vector<64x1xf32>
    %55 = arith.addf %50, %54 : vector<64x1xf32>
    %c0_22 = arith.constant 0 : index
    %c0_23 = arith.constant 0 : index
    %56 = vector.load %arg9[%c0_22, %c0_23] : memref<64x1xf32, #tpu.memory_space<vmem>>, vector<64x1xf32>
    tpu.vector_store %arg9[%c0_22, %c0_23], %55 {strides = array<i32>} : memref<64x1xf32, #tpu.memory_space<vmem>>, vector<64x1xf32>,
    %c0_24 = arith.constant 0 : index
    %c0_25 = arith.constant 0 : index
    %57 = vector.load %arg10[%c0_24, %c0_25] : memref<64x1xf32, #tpu.memory_space<vmem>>, vector<64x1xf32>
    %58 = arith.mulf %33, %57 : vector<64x1xf32>
    %cst_26 = arith.constant 0.000000e+00 : f32
    %59 = vector.broadcast %cst_26 : f32 to vector<64x128xf32>
    %60 = arith.select %48, %59, %38 : vector<64x128xi1>, vector<64x128xf32>
    %cst_27 = arith.constant dense<0.000000e+00> : vector<64xf32>
    %61 = vector.multi_reduction <add>, %60, %cst_27 [1] : vector<64x128xf32> to vector<64xf32>
    %62 = vector.shape_cast %61 : vector<64xf32> to vector<64x1xf32>
    %63 = arith.addf %58, %62 : vector<64x1xf32>
    %c0_28 = arith.constant 0 : index
    %c0_29 = arith.constant 0 : index
    %64 = vector.load %arg10[%c0_28, %c0_29] : memref<64x1xf32, #tpu.memory_space<vmem>>, vector<64x1xf32>
    tpu.vector_store %arg10[%c0_28, %c0_29], %63 {strides = array<i32>} : memref<64x1xf32, #tpu.memory_space<vmem>>, vector<64x1xf32>,
    %65 = arith.andi %43, %21 : vector<64x128xi1>
    %c0_30 = arith.constant 0 : index
    %c0_31 = arith.constant 0 : index
    %66 = vector.load %arg12[%c0_30, %c0_31] : memref<64x1xf32, #tpu.memory_space<vmem>>, vector<64x1xf32>
    %cst_32 = arith.constant 1.000000e+00 : f32
    %cst_33 = arith.constant 0.000000e+00 : f32
    %67 = vector.broadcast %cst_32 : f32 to vector<64x128xf32>
    %68 = vector.broadcast %cst_33 : f32 to vector<64x128xf32>
    %69 = arith.select %65, %67, %68 : vector<64x128xi1>, vector<64x128xf32>
    %cst_34 = arith.constant dense<0.000000e+00> : vector<64xf32>
    %70 = vector.multi_reduction <add>, %69, %cst_34 [1] : vector<64x128xf32> to vector<64xf32>
    %71 = vector.shape_cast %70 : vector<64xf32> to vector<64x1xf32>
    %72 = arith.addf %66, %71 : vector<64x1xf32>
    %c0_35 = arith.constant 0 : index
    %c0_36 = arith.constant 0 : index
    %73 = vector.load %arg12[%c0_35, %c0_36] : memref<64x1xf32, #tpu.memory_space<vmem>>, vector<64x1xf32>
    tpu.vector_store %arg12[%c0_35, %c0_36], %72 {strides = array<i32>} : memref<64x1xf32, #tpu.memory_space<vmem>>, vector<64x1xf32>,
    %c0_37 = arith.constant 0 : index
    %c0_38 = arith.constant 0 : index
    %74 = vector.load %arg11[%c0_37, %c0_38] : memref<64x1xf32, #tpu.memory_space<vmem>>, vector<64x1xf32>
    %cst_39 = arith.constant 0.000000e+00 : f32
    %75 = vector.broadcast %cst_39 : f32 to vector<64x128xf32>
    %76 = arith.select %65, %27, %75 : vector<64x128xi1>, vector<64x128xf32>
    %cst_40 = arith.constant dense<0.000000e+00> : vector<64xf32>
    %77 = vector.multi_reduction <add>, %76, %cst_40 [1] : vector<64x128xf32> to vector<64xf32>
    %78 = vector.shape_cast %77 : vector<64xf32> to vector<64x1xf32>
    %79 = arith.addf %74, %78 : vector<64x1xf32>
    %c0_41 = arith.constant 0 : index
    %c0_42 = arith.constant 0 : index
    %80 = vector.load %arg11[%c0_41, %c0_42] : memref<64x1xf32, #tpu.memory_space<vmem>>, vector<64x1xf32>
    tpu.vector_store %arg11[%c0_41, %c0_42], %79 {strides = array<i32>} : memref<64x1xf32, #tpu.memory_space<vmem>>, vector<64x1xf32>,
    %c0_43 = arith.constant 0 : index
    %c0_44 = arith.constant 0 : index
    %81 = vector.load %arg8[%c0_43, %c0_44] : memref<64x1xf32, #tpu.memory_space<vmem>>, vector<64x1xf32>
    tpu.vector_store %arg8[%c0_43, %c0_44], %31 {strides = array<i32>} : memref<64x1xf32, #tpu.memory_space<vmem>>, vector<64x1xf32>,
    %c0_i32_45 = arith.constant 0 : i32
    %82 = arith.cmpi eq, %arg1, %c0_i32_45 : i32
    %83 = arith.extui %82 : i1 to i32
    %c0_i32_46 = arith.constant 0 : i32
    %84 = arith.cmpi ne, %83, %c0_i32_46 : i32
    scf.if %84 {
      %c0_47 = arith.constant 0 : index
      %c0_48 = arith.constant 0 : index
      %85 = vector.load %arg9[%c0_47, %c0_48] : memref<64x1xf32, #tpu.memory_space<vmem>>, vector<64x1xf32>
      %86 = math.log %85 : vector<64x1xf32>
      %cst_49 = arith.constant 6.000000e-01 : f32
      %87 = vector.broadcast %cst_49 : f32 to vector<64x1xf32>
      %88 = arith.mulf %87, %86 : vector<64x1xf32>
      %c0_50 = arith.constant 0 : index
      %c0_51 = arith.constant 0 : index
      %89 = vector.load %arg10[%c0_50, %c0_51] : memref<64x1xf32, #tpu.memory_space<vmem>>, vector<64x1xf32>
      %90 = math.log %89 : vector<64x1xf32>
      %cst_52 = arith.constant 4.000000e-01 : f32
      %91 = vector.broadcast %cst_52 : f32 to vector<64x1xf32>
      %92 = arith.mulf %91, %90 : vector<64x1xf32>
      %93 = arith.addf %88, %92 : vector<64x1xf32>
      %c0_53 = arith.constant 0 : index
      %c0_54 = arith.constant 0 : index
      %94 = vector.load %arg8[%c0_53, %c0_54] : memref<64x1xf32, #tpu.memory_space<vmem>>, vector<64x1xf32>
      %95 = arith.addf %93, %94 : vector<64x1xf32>
      %c0_55 = arith.constant 0 : index
      %c0_56 = arith.constant 0 : index
      %96 = vector.load %arg11[%c0_55, %c0_56] : memref<64x1xf32, #tpu.memory_space<vmem>>, vector<64x1xf32>
      %c0_57 = arith.constant 0 : index
      %c0_58 = arith.constant 0 : index
      %97 = vector.load %arg12[%c0_57, %c0_58] : memref<64x1xf32, #tpu.memory_space<vmem>>, vector<64x1xf32>
      %98 = arith.divf %96, %97 : vector<64x1xf32>
      %99 = arith.subf %95, %98 : vector<64x1xf32>
      %c0_59 = arith.constant 0 : index
      %c0_60 = arith.constant 0 : index
      %100 = vector.load %arg7[%c0_59, %c0_60] : memref<64x1xf32, #tpu.memory_space<vmem>>, vector<64x1xf32>
      tpu.vector_store %arg7[%c0_59, %c0_60], %99 {strides = array<i32>} : memref<64x1xf32, #tpu.memory_space<vmem>>, vector<64x1xf32>,
    } else {
    }
    return
  }
  func.func @transform_0(%arg0: i32, %arg1: i32) -> (i32, i32) {
    %c0_i32 = arith.constant 0 : i32
    %c0_i32_0 = arith.constant 0 : i32
    %c0_i32_1 = arith.constant 0 : i32
    return %c0_i32, %c0_i32_0 : i32, i32
  }
  func.func @transform_1(%arg0: i32, %arg1: i32) -> (i32, i32) {
    %c0_i32 = arith.constant 0 : i32
    %c0_i32_0 = arith.constant 0 : i32
    return %arg0, %c0_i32 : i32, i32
  }
  func.func @transform_2(%arg0: i32, %arg1: i32) -> (i32, i32) {
    %c0_i32 = arith.constant 0 : i32
    %c0_i32_0 = arith.constant 0 : i32
    return %arg1, %c0_i32 : i32, i32
  }
  func.func @transform_3(%arg0: i32, %arg1: i32) -> (i32, i32) {
    %c0_i32 = arith.constant 0 : i32
    %c0_i32_0 = arith.constant 0 : i32
    return %arg0, %c0_i32 : i32, i32
  }
  func.func @transform_4(%arg0: i32, %arg1: i32) -> (i32, i32) {
    %c0_i32 = arith.constant 0 : i32
    %c0_i32_0 = arith.constant 0 : i32
    return %c0_i32, %arg1 : i32, i32
  }
  func.func @transform_5(%arg0: i32, %arg1: i32) -> (i32, i32) {
    %c0_i32 = arith.constant 0 : i32
    %c0_i32_0 = arith.constant 0 : i32
    return %arg0, %c0_i32 : i32, i32
  }
}

</mosaic_0001>

<llo_original>
// kernel: tpu_custom_call.1
$region0: #{tpu_custom_call.1}
  #allocation0 [shape = 'u32[]', space=smem, size = 0x4, offset = 0x4, fixed_abs, tag = 'smem constant byte address 0x4 - core index']
  #allocation1 [shape = 'u32[72,128]{1,0:T(1,128)}', space=vmem, size = 0x9000, scoped, tag = 'internal scratch']
  #allocation2 [shape = 'f32[64,1]{1,0:T(8,128)}', space=vmem, size = 0x8000, scoped, tag = 'scratch operand']
  #allocation3 [shape = 'f32[64,1]{1,0:T(8,128)}', space=vmem, size = 0x8000, scoped, tag = 'scratch operand']
  #allocation4 [shape = 'f32[64,1]{1,0:T(8,128)}', space=vmem, size = 0x8000, scoped, tag = 'scratch operand']
  #allocation5 [shape = 'f32[64,1]{1,0:T(8,128)}', space=vmem, size = 0x8000, scoped, tag = 'scratch operand']
  #allocation6 [shape = 'f32[64,1]{1,0:T(8,128)}', space=vmem, size = 0x8000, scoped, tag = 'scratch operand']
  #allocation7 [shape = 'f32[1,1]{1,0:T(1,128)S(6)}', space=smem, size = 0x200, scoped, tag = 'scoped memory for tpu_custom_call.1']
  %s0 = inlined_call_operand.<no memory space> [shape: f32[1,1], index: 0, kind: input, shape index: {}]
  %s1 = inlined_call_operand.vmem [shape: bf16[128,32], index: 1, kind: input, shape index: {}]
  %s2 = inlined_call_operand.vmem [shape: bf16[128,32], index: 2, kind: input, shape index: {}]
  %s3 = inlined_call_operand.vmem [shape: s32[128,2], index: 3, kind: input, shape index: {}]
  %s4 = inlined_call_operand.vmem [shape: s32[2,128], index: 4, kind: input, shape index: {}]
  %s5 = inlined_call_operand.vmem [shape: f32[128,1], index: 5, kind: output, shape index: {}]
  %s6 = sld [smem:[#allocation0]]
  $region61: #{tpu_custom_call.1} parent=0
    _
  %s8 = ssub.s32 1, %s6
  %s9 = scalar_select 0, %s8, %s6
  %10 = sst [smem:[#allocation7]] %s0
  loop: start=0, step=1, limit=4
  $region2: #{tpu_custom_call.1} parent=0 // loop_pre_header
    _
  $region3: #{tpu_custom_call.1} parent=0 // loop_header
    %s12 = sphi 0, %s16
    %p13 = scmp.ge.s32.totalorder %s12, 4
    %s19 = sphi 0, %s31
    %s20 = sphi 0, %s27
    %s21 = sphi 0, %s19
    %s22 = sphi 0, %s20
    %s23 = sphi 0, %s21
    %s24 = sphi 0, %s22
    %s32 = sphi 0, %s32
    %s34 = sphi 0, %s32
    %s35 = sphi 0, %s34
    %s49 = sphi 0, %s35
    %s55 = sphi 0, %s57
    %s58 = sphi 0, %s55
    %s59 = sphi 0, %s58
    %s75 = sphi 0, %s59
    %s81 = sphi 0, %s83
    %s84 = sphi 0, %s81
    %s85 = sphi 0, %s84
    %s101 = sphi 0, %s85
    %s107 = sphi 0, %s109
    %s110 = sphi 0, %s107
    %s111 = sphi 0, %s110
    %s127 = sphi 0, %s111
    %s133 = sphi 0, %s135
    %s136 = sphi 0, %s133
    %s137 = sphi 0, %s136
    %s153 = sphi 0, %s137
    %s159 = sphi 0, %s161
    %s162 = sphi 0, %s159
    %s163 = sphi 0, %s162
    %s179 = sphi 0, %s163
  $region4: #{tpu_custom_call.1} parent=0 // loop_header_branch
    %15 = sbr.rel (%p13) target = $region8
  $region5: #{tpu_custom_call.1} parent=0 // loop_body
    %s17 = ssub.s32 %s12, 1
    %s18 = ssub.s32 %s12, 2
    %s25 = sadd.s32 1, %s20
    %p26 = scmp.ge.s32.totalorder %s25, 1
    %s27 = scalar_select %p26, 0, %s25
    %s28 = sadd.s32 1, %s19
    %s29 = scalar_select %p26, %s28, %s19
    %p30 = scmp.ge.s32.totalorder %s29, 2
    %s31 = scalar_select %p30, 0, %s29
    %s33 = sadd.s32 %s32, 1
    %p36 = scmp.eq.s32.totalorder %s12, 1
    %p37 = scmp.ne.s32.totalorder %s32, %s34
    %p38 = scmp.eq.s32.totalorder %s12, 0
    %p39 = por %p37, %p38
    %p40 = scmp.ne.s32.totalorder %s32, %s34
    %p41 = scmp.eq.s32.totalorder %s17, 1
    %p42 = por %p40, %p41
    %p43 = scmp.ne.s32.totalorder %s34, %s35
    %p44 = scmp.eq.s32.totalorder %s17, 0
    %p45 = por %p43, %p44
    %p46 = scmp.ne.s32.totalorder %s34, %s35
    %p47 = scmp.eq.s32.totalorder %s18, 1
    %p48 = por %p46, %p47
    %p50 = scmp.ne.s32.totalorder %s35, %s49
    %p51 = scmp.eq.s32.totalorder %s18, 0
    %p52 = por %p50, %p51
    %s53 = ssub.s32 %s19, %s31
    %p54 = scmp.eq.s32.totalorder %s53, 0
    %s56 = sadd.s32 %s55, 1
    %s57 = scalar_select %p54, %s55, %s56
    %p60 = pneg %p54
    %p61 = scmp.eq.s32.totalorder %s12, 1
    %p62 = por %p60, %p61
    %p63 = scmp.ne.s32.totalorder %s55, %s58
    %p64 = scmp.eq.s32.totalorder %s12, 0
    %p65 = por %p63, %p64
    %p66 = scmp.ne.s32.totalorder %s55, %s58
    %p67 = scmp.eq.s32.totalorder %s17, 1
    %p68 = por %p66, %p67
    %p69 = scmp.ne.s32.totalorder %s58, %s59
    %p70 = scmp.eq.s32.totalorder %s17, 0
    %p71 = por %p69, %p70
    %p72 = scmp.ne.s32.totalorder %s58, %s59
    %p73 = scmp.eq.s32.totalorder %s18, 1
    %p74 = por %p72, %p73
    %p76 = scmp.ne.s32.totalorder %s59, %s75
    %p77 = scmp.eq.s32.totalorder %s18, 0
    %p78 = por %p76, %p77
    %s79 = ssub.s32 %s20, %s27
    %p80 = scmp.eq.s32.totalorder %s79, 0
    %s82 = sadd.s32 %s81, 1
    %s83 = scalar_select %p80, %s81, %s82
    %p86 = pneg %p80
    %p87 = scmp.eq.s32.totalorder %s12, 1
    %p88 = por %p86, %p87
    %p89 = scmp.ne.s32.totalorder %s81, %s84
    %p90 = scmp.eq.s32.totalorder %s12, 0
    %p91 = por %p89, %p90
    %p92 = scmp.ne.s32.totalorder %s81, %s84
    %p93 = scmp.eq.s32.totalorder %s17, 1
    %p94 = por %p92, %p93
    %p95 = scmp.ne.s32.totalorder %s84, %s85
    %p96 = scmp.eq.s32.totalorder %s17, 0
    %p97 = por %p95, %p96
    %p98 = scmp.ne.s32.totalorder %s84, %s85
    %p99 = scmp.eq.s32.totalorder %s18, 1
    %p100 = por %p98, %p99
    %p102 = scmp.ne.s32.totalorder %s85, %s101
    %p103 = scmp.eq.s32.totalorder %s18, 0
    %p104 = por %p102, %p103
    %s105 = ssub.s32 %s19, %s31
    %p106 = scmp.eq.s32.totalorder %s105, 0
    %s108 = sadd.s32 %s107, 1
    %s109 = scalar_select %p106, %s107, %s108
    %p112 = pneg %p106
    %p113 = scmp.eq.s32.totalorder %s12, 1
    %p114 = por %p112, %p113
    %p115 = scmp.ne.s32.totalorder %s107, %s110
    %p116 = scmp.eq.s32.totalorder %s12, 0
    %p117 = por %p115, %p116
    %p118 = scmp.ne.s32.totalorder %s107, %s110
    %p119 = scmp.eq.s32.totalorder %s17, 1
    %p120 = por %p118, %p119
    %p121 = scmp.ne.s32.totalorder %s110, %s111
    %p122 = scmp.eq.s32.totalorder %s17, 0
    %p123 = por %p121, %p122
    %p124 = scmp.ne.s32.totalorder %s110, %s111
    %p125 = scmp.eq.s32.totalorder %s18, 1
    %p126 = por %p124, %p125
    %p128 = scmp.ne.s32.totalorder %s111, %s127
    %p129 = scmp.eq.s32.totalorder %s18, 0
    %p130 = por %p128, %p129
    %s131 = ssub.s32 %s20, %s27
    %p132 = scmp.eq.s32.totalorder %s131, 0
    %s134 = sadd.s32 %s133, 1
    %s135 = scalar_select %p132, %s133, %s134
    %p138 = pneg %p132
    %p139 = scmp.eq.s32.totalorder %s12, 1
    %p140 = por %p138, %p139
    %p141 = scmp.ne.s32.totalorder %s133, %s136
    %p142 = scmp.eq.s32.totalorder %s12, 0
    %p143 = por %p141, %p142
    %p144 = scmp.ne.s32.totalorder %s133, %s136
    %p145 = scmp.eq.s32.totalorder %s17, 1
    %p146 = por %p144, %p145
    %p147 = scmp.ne.s32.totalorder %s136, %s137
    %p148 = scmp.eq.s32.totalorder %s17, 0
    %p149 = por %p147, %p148
    %p150 = scmp.ne.s32.totalorder %s136, %s137
    %p151 = scmp.eq.s32.totalorder %s18, 1
    %p152 = por %p150, %p151
    %p154 = scmp.ne.s32.totalorder %s137, %s153
    %p155 = scmp.eq.s32.totalorder %s18, 0
    %p156 = por %p154, %p155
    %s157 = ssub.s32 %s19, %s31
    %p158 = scmp.eq.s32.totalorder %s157, 0
    %s160 = sadd.s32 %s159, 1
    %s161 = scalar_select %p158, %s159, %s160
    %p164 = pneg %p158
    %p165 = scmp.eq.s32.totalorder %s12, 1
    %p166 = por %p164, %p165
    %p167 = scmp.ne.s32.totalorder %s159, %s162
    %p168 = scmp.eq.s32.totalorder %s12, 0
    %p169 = por %p167, %p168
    %p170 = scmp.ne.s32.totalorder %s159, %s162
    %p171 = scmp.eq.s32.totalorder %s17, 1
    %p172 = por %p170, %p171
    %p173 = scmp.ne.s32.totalorder %s162, %s163
    %p174 = scmp.eq.s32.totalorder %s17, 0
    %p175 = por %p173, %p174
    %p176 = scmp.ne.s32.totalorder %s162, %s163
    %p177 = scmp.eq.s32.totalorder %s18, 1
    %p178 = por %p176, %p177
    %p180 = scmp.ne.s32.totalorder %s163, %s179
    %p181 = scmp.eq.s32.totalorder %s18, 0
    %p182 = por %p180, %p181
    %p183 = scmp.le.s32.totalorder 1, %s12
    %p184 = scmp.lt.s32.totalorder %s12, 3
    %p185 = pnand %p183, %p184
    %p186 = pneg %p185
    // Predicated region
    $region9: #{tpu_custom_call.1} parent=5 // pred_check
      _
    $region10: #{tpu_custom_call.1} parent=5 // pred_check_branch
      %188 = sbr.rel (%p185) target = $region12
    $region11: #{tpu_custom_call.1} parent=5 // pred_region
      %s189 = ssub.s32 %s12, 1
      // Predicated region
      $region13: #{tpu_custom_call.1} parent=11 // pred_check
        %p190 = pneg %p45
      $region14: #{tpu_custom_call.1} parent=11 // pred_check_branch
        %192 = sbr.rel (%p190) target = $region16
      $region15: #{tpu_custom_call.1} parent=11 // pred_region
        _
      $region16: #{tpu_custom_call.1} parent=11 // pred_fallthru
        _
      // Predicated region
      $region17: #{tpu_custom_call.1} parent=11 // pred_check
        %p193 = pneg %p97
      $region18: #{tpu_custom_call.1} parent=11 // pred_check_branch
        %195 = sbr.rel (%p193) target = $region20
      $region19: #{tpu_custom_call.1} parent=11 // pred_region
        %s196 = smul.u32 16, %s22
        %p197 = scmp.lt.s32.totalorder %s196, 15
        %s198 = scalar_select %p197, %s196, 15
        %s199 = smul.addr %s198, 4
        %s200 = scalar_lea.vmem %s2, %s199
        %s201 = smul.u32 16, %s22
      $region20: #{tpu_custom_call.1} parent=11 // pred_fallthru
        _
      // Predicated region
      $region21: #{tpu_custom_call.1} parent=11 // pred_check
        %p202 = pneg %p149
      $region22: #{tpu_custom_call.1} parent=11 // pred_check_branch
        %204 = sbr.rel (%p202) target = $region24
      $region23: #{tpu_custom_call.1} parent=11 // pred_region
        %p205 = scmp.lt.s32.totalorder %s22, 0
        %s206 = scalar_select %p205, %s22, 0
        %s207 = smul.addr %s206, 2
        %s208 = scalar_lea.vmem %s4, %s207
      $region24: #{tpu_custom_call.1} parent=11 // pred_fallthru
        _
    $region12: #{tpu_custom_call.1} parent=5 // pred_fallthru
      _
    %p209 = scmp.lt.s32.totalorder %s12, 2
    // Predicated region
    $region25: #{tpu_custom_call.1} parent=5 // pred_check
      %p210 = pneg %p209
    $region26: #{tpu_custom_call.1} parent=5 // pred_check_branch
      %212 = sbr.rel (%p210) target = $region28
    $region27: #{tpu_custom_call.1} parent=5 // pred_region
      // Predicated region
      $region29: #{tpu_custom_call.1} parent=27 // pred_check
        %p213 = pneg %p65
      $region30: #{tpu_custom_call.1} parent=27 // pred_check_branch
        %215 = sbr.rel (%p213) target = $region32
      $region31: #{tpu_custom_call.1} parent=27 // pred_region
        %s216 = smul.u32 8, %s19
        %p217 = scmp.lt.s32.totalorder %s216, 15
        %s218 = scalar_select %p217, %s216, 15
        %s219 = smul.addr %s218, 4
        %s220 = scalar_lea.vmem %s1, %s219
        %s221 = smul.u32 8, %s19
      $region32: #{tpu_custom_call.1} parent=27 // pred_fallthru
        _
      // Predicated region
      $region33: #{tpu_custom_call.1} parent=27 // pred_check
        %p222 = pneg %p117
      $region34: #{tpu_custom_call.1} parent=27 // pred_check_branch
        %224 = sbr.rel (%p222) target = $region36
      $region35: #{tpu_custom_call.1} parent=27 // pred_region
        %s225 = smul.u32 8, %s19
        %p226 = scmp.lt.s32.totalorder %s225, 15
        %s227 = scalar_select %p226, %s225, 15
        %s228 = smul.addr %s227, 8
        %s229 = scalar_lea.vmem %s3, %s228
        %s230 = smul.u32 8, %s19
      $region36: #{tpu_custom_call.1} parent=27 // pred_fallthru
        _
    $region28: #{tpu_custom_call.1} parent=5 // pred_fallthru
      _
    %p231 = scmp.le.s32.totalorder 1, %s12
    %p232 = scmp.lt.s32.totalorder %s12, 3
    %p233 = pnand %p231, %p232
    %p234 = pneg %p233
    // Predicated region
    $region37: #{tpu_custom_call.1} parent=5 // pred_check
      _
    $region38: #{tpu_custom_call.1} parent=5 // pred_check_branch
      %236 = sbr.rel (%p233) target = $region40
    $region39: #{tpu_custom_call.1} parent=5 // pred_region
      %s237 = ssub.s32 %s12, 1
      %p238 = pneg %p45
      %p239 = pneg %p42
      %s240 = smul.u32 8, %s21
      %p241 = scmp.lt.s32.totalorder %s240, 15
      %s242 = scalar_select %p241, %s240, 15
      %s243 = smul.addr %s242, 4
      %s244 = scalar_lea.vmem %s1, %s243
      %p245 = pneg %p71
      %p246 = pneg %p68
      %s247 = smul.u32 16, %s22
      %p248 = scmp.lt.s32.totalorder %s247, 15
      %s249 = scalar_select %p248, %s247, 15
      %s250 = smul.addr %s249, 4
      %s251 = scalar_lea.vmem %s2, %s250
      %p252 = pneg %p97
      %p253 = pneg %p94
      %s254 = smul.u32 8, %s21
      %p255 = scmp.lt.s32.totalorder %s254, 15
      %s256 = scalar_select %p255, %s254, 15
      %s257 = smul.addr %s256, 8
      %s258 = scalar_lea.vmem %s3, %s257
      %p259 = pneg %p123
      %p260 = pneg %p120
      %p261 = scmp.lt.s32.totalorder %s22, 0
      %s262 = scalar_select %p261, %s22, 0
      %s263 = smul.addr %s262, 2
      %s264 = scalar_lea.vmem %s4, %s263
      %p265 = pneg %p149
      %p266 = pneg %p146
      %p267 = pneg %p175
      %p268 = pneg %p172
      %s269 = smul.u32 8, %s21
      %p270 = scmp.lt.s32.totalorder %s269, 15
      %s271 = scalar_select %p270, %s269, 15
      %s272 = smul.addr %s271, 8
      %s273 = scalar_lea.vmem %s5, %s272
      %s274 = smul.u32 8, %s21
      %p275 = scmp.lt.s32.totalorder %s274, 15
      %s276 = scalar_select %p275, %s274, 15
      %s277 = smul.addr %s276, 4
      %s278 = scalar_lea.vmem %s1, %s277
      %s279 = smul.u32 8, %s21
      %s280 = smul.u32 16, %s22
      %p281 = scmp.lt.s32.totalorder %s280, 15
      %s282 = scalar_select %p281, %s280, 15
      %s283 = smul.addr %s282, 4
      %s284 = scalar_lea.vmem %s2, %s283
      %s285 = smul.u32 16, %s22
      %s286 = smul.u32 8, %s21
      %p287 = scmp.lt.s32.totalorder %s286, 15
      %s288 = scalar_select %p287, %s286, 15
      %s289 = smul.addr %s288, 8
      %s290 = scalar_lea.vmem %s3, %s289
      %s291 = smul.u32 8, %s21
      %p292 = scmp.lt.s32.totalorder %s22, 0
      %s293 = scalar_select %p292, %s22, 0
      %s294 = smul.addr %s293, 2
      %s295 = scalar_lea.vmem %s4, %s294
      %s296 = smul.u32 8, %s21
      %p297 = scmp.lt.s32.totalorder %s296, 15
      %s298 = scalar_select %p297, %s296, 15
      %s299 = smul.addr %s298, 8
      %s300 = scalar_lea.vmem %s5, %s299
      %s301 = smul.u32 8, %s21
      %p302 = scmp.eq.s32.totalorder %s22, 0
      // Predicated region
      $region41: #{tpu_custom_call.1} parent=39 // pred_check
        %p303 = pneg %p302
      $region42: #{tpu_custom_call.1} parent=39 // pred_check_branch
        %305 = sbr.rel (%p303) target = $region44
      $region43: #{tpu_custom_call.1} parent=39 // pred_region
        %vm306 = vcmask 7168
        %307 = vst.msk [vmem:[#allocation2] sm:$0xff] %vm306, -inf
        %308 = vst.msk [vmem:[#allocation2 + $0x8] sm:$0xff] %vm306, -inf
        %309 = vst.msk [vmem:[#allocation2 + $0x10] sm:$0xff] %vm306, -inf
        %310 = vst.msk [vmem:[#allocation2 + $0x18] sm:$0xff] %vm306, -inf
        %311 = vst.msk [vmem:[#allocation2 + $0x20] sm:$0xff] %vm306, -inf
        %312 = vst.msk [vmem:[#allocation2 + $0x28] sm:$0xff] %vm306, -inf
        %313 = vst.msk [vmem:[#allocation2 + $0x30] sm:$0xff] %vm306, -inf
        %314 = vst.msk [vmem:[#allocation2 + $0x38] sm:$0xff] %vm306, -inf
        %315 = vst.msk [vmem:[#allocation3] sm:$0xff] %vm306, 0.0
        %316 = vst.msk [vmem:[#allocation3 + $0x8] sm:$0xff] %vm306, 0.0
        %317 = vst.msk [vmem:[#allocation3 + $0x10] sm:$0xff] %vm306, 0.0
        %318 = vst.msk [vmem:[#allocation3 + $0x18] sm:$0xff] %vm306, 0.0
        %319 = vst.msk [vmem:[#allocation3 + $0x20] sm:$0xff] %vm306, 0.0
        %320 = vst.msk [vmem:[#allocation3 + $0x28] sm:$0xff] %vm306, 0.0
        %321 = vst.msk [vmem:[#allocation3 + $0x30] sm:$0xff] %vm306, 0.0
        %322 = vst.msk [vmem:[#allocation3 + $0x38] sm:$0xff] %vm306, 0.0
        %323 = vst.msk [vmem:[#allocation4] sm:$0xff] %vm306, 0.0
        %324 = vst.msk [vmem:[#allocation4 + $0x8] sm:$0xff] %vm306, 0.0
        %325 = vst.msk [vmem:[#allocation4 + $0x10] sm:$0xff] %vm306, 0.0
        %326 = vst.msk [vmem:[#allocation4 + $0x18] sm:$0xff] %vm306, 0.0
        %327 = vst.msk [vmem:[#allocation4 + $0x20] sm:$0xff] %vm306, 0.0
        %328 = vst.msk [vmem:[#allocation4 + $0x28] sm:$0xff] %vm306, 0.0
        %329 = vst.msk [vmem:[#allocation4 + $0x30] sm:$0xff] %vm306, 0.0
        %330 = vst.msk [vmem:[#allocation4 + $0x38] sm:$0xff] %vm306, 0.0
        %331 = vst.msk [vmem:[#allocation5] sm:$0xff] %vm306, 0.0
        %332 = vst.msk [vmem:[#allocation5 + $0x8] sm:$0xff] %vm306, 0.0
        %333 = vst.msk [vmem:[#allocation5 + $0x10] sm:$0xff] %vm306, 0.0
        %334 = vst.msk [vmem:[#allocation5 + $0x18] sm:$0xff] %vm306, 0.0
        %335 = vst.msk [vmem:[#allocation5 + $0x20] sm:$0xff] %vm306, 0.0
        %336 = vst.msk [vmem:[#allocation5 + $0x28] sm:$0xff] %vm306, 0.0
        %337 = vst.msk [vmem:[#allocation5 + $0x30] sm:$0xff] %vm306, 0.0
        %338 = vst.msk [vmem:[#allocation5 + $0x38] sm:$0xff] %vm306, 0.0
        %339 = vst.msk [vmem:[#allocation6] sm:$0xff] %vm306, 0.0
        %340 = vst.msk [vmem:[#allocation6 + $0x8] sm:$0xff] %vm306, 0.0
        %341 = vst.msk [vmem:[#allocation6 + $0x10] sm:$0xff] %vm306, 0.0
        %342 = vst.msk [vmem:[#allocation6 + $0x18] sm:$0xff] %vm306, 0.0
        %343 = vst.msk [vmem:[#allocation6 + $0x20] sm:$0xff] %vm306, 0.0
        %344 = vst.msk [vmem:[#allocation6 + $0x28] sm:$0xff] %vm306, 0.0
        %345 = vst.msk [vmem:[#allocation6 + $0x30] sm:$0xff] %vm306, 0.0
        %346 = vst.msk [vmem:[#allocation6 + $0x38] sm:$0xff] %vm306, 0.0
      $region44: #{tpu_custom_call.1} parent=39 // pred_fallthru
        _
      %v347 = vld [vmem:[%s278] sm:$0xf]
      %v348 = vld [vmem:[%s278 + $0x4] sm:$0xf]
      %v349 = vld [vmem:[%s278 + $0x8] sm:$0xf]
      %v350 = vld [vmem:[%s278 + $0xc] sm:$0xf]
      %v351 = vld [vmem:[%s278 + $0x10] sm:$0xf]
      %v352 = vld [vmem:[%s278 + $0x14] sm:$0xf]
      %v353 = vld [vmem:[%s278 + $0x18] sm:$0xf]
      %v354 = vld [vmem:[%s278 + $0x1c] sm:$0xf]
      %v355 = vunpack.c.l.bf16 %v347
      %v356 = vunpack.c.l.bf16 %v348
      %v357 = vunpack.c.l.bf16 %v349
      %v358 = vunpack.c.l.bf16 %v350
      %v359 = vunpack.c.l.bf16 %v351
      %v360 = vunpack.c.l.bf16 %v352
      %v361 = vunpack.c.l.bf16 %v353
      %v362 = vunpack.c.l.bf16 %v354
      %s363 = sld [smem:[#allocation7]]
      %v364 = vstv %s363
      %v365 = vrcp.pop %v364
      %v366 = vmul.f32 %v364, %v365
      %v367 = vsub.f32 1.0, %v366
      %v368 = vmul.f32 %v365, %v367
      %v369 = vadd.f32 %v365, %v368
      %vm370 = vweird.f32 %v364
      %vm371 = vweird.f32 %v365
      %vm372 = vmor %vm370, %vm371
      %v373 = vsel %vm372, %v365, %v369
      %v374 = vand.u32 2147483647, %v364
      %vm375 = vcmp.eq.f32.partialorder %v374, 8.507059e+37
      %v376 = vand.u32 %v364, 2147483648
      %v377 = vor.u32 1.1754944e-38, %v376
      %v378 = vsel %vm375, %v377, %v373
      %v379 = vmul.f32 %v355, %v378
      %v380 = vmul.f32 %v356, %v378
      %v381 = vmul.f32 %v357, %v378
      %v382 = vmul.f32 %v358, %v378
      %v383 = vmul.f32 %v359, %v378
      %v384 = vmul.f32 %v360, %v378
      %v385 = vmul.f32 %v361, %v378
      %v386 = vmul.f32 %v362, %v378
      %v387 = vpack.c.bf16 %v380, %v379
      %v388 = vpack.c.bf16 %v382, %v381
      %v389 = vpack.c.bf16 %v384, %v383
      %v390 = vpack.c.bf16 %v386, %v385
      %v391 = vld [vmem:[%s284] sm:$0xf]
      %v392 = vld [vmem:[%s284 + $0x4] sm:$0xf]
      %v393 = vld [vmem:[%s284 + $0x8] sm:$0xf]
      %v394 = vld [vmem:[%s284 + $0xc] sm:$0xf]
      %v395 = vld [vmem:[%s284 + $0x10] sm:$0xf]
      %v396 = vld [vmem:[%s284 + $0x14] sm:$0xf]
      %v397 = vld [vmem:[%s284 + $0x18] sm:$0xf]
      %v398 = vld [vmem:[%s284 + $0x1c] sm:$0xf]
      %v399 = vld [vmem:[%s284 + $0x20] sm:$0xf]
      %v400 = vld [vmem:[%s284 + $0x24] sm:$0xf]
      %v401 = vld [vmem:[%s284 + $0x28] sm:$0xf]
      %v402 = vld [vmem:[%s284 + $0x2c] sm:$0xf]
      %v403 = vld [vmem:[%s284 + $0x30] sm:$0xf]
      %v404 = vld [vmem:[%s284 + $0x34] sm:$0xf]
      %v405 = vld [vmem:[%s284 + $0x38] sm:$0xf]
      %v406 = vld [vmem:[%s284 + $0x3c] sm:$0xf]
      %v423 = vunpack.c.l.b16 %v391
      %v424 = vunpack.c.l.b16 %v392
      %v425 = vunpack.c.l.b16 %v393
      %v426 = vunpack.c.l.b16 %v394
      %v427 = vunpack.c.l.b16 %v395
      %v428 = vunpack.c.l.b16 %v396
      %v429 = vunpack.c.l.b16 %v397
      %v430 = vunpack.c.l.b16 %v398
      %v431 = vunpack.c.l.b16 %v399
      %v432 = vunpack.c.l.b16 %v400
      %v433 = vunpack.c.l.b16 %v401
      %v434 = vunpack.c.l.b16 %v402
      %v435 = vunpack.c.l.b16 %v403
      %v436 = vunpack.c.l.b16 %v404
      %v437 = vunpack.c.l.b16 %v405
      %v438 = vunpack.c.l.b16 %v406
      %v439 = vpack.c.b16 %v424, %v423
      %v440 = vpack.c.b16 %v426, %v425
      %v441 = vpack.c.b16 %v428, %v427
      %v442 = vpack.c.b16 %v430, %v429
      %v443 = vpack.c.b16 %v432, %v431
      %v444 = vpack.c.b16 %v434, %v433
      %v445 = vpack.c.b16 %v436, %v435
      %v446 = vpack.c.b16 %v438, %v437
      %vm447 = vcmask 261120
      %v449 = vsel %vm447, %v387, 0
      %v452 = vsel %vm447, %v388, 0
      %v455 = vsel %vm447, %v389, 0
      %v458 = vsel %vm447, %v390, 0
      %v461 = vsel %vm447, %v439, 0
      %v464 = vsel %vm447, %v440, 0
      %v467 = vsel %vm447, %v441, 0
      %v470 = vsel %vm447, %v442, 0
      %v473 = vsel %vm447, %v443, 0
      %v476 = vsel %vm447, %v444, 0
      %v479 = vsel %vm447, %v445, 0
      %v482 = vsel %vm447, %v446, 0
      %484 = vmatpush.bf16.xpose.msra.mxu0 %v482
      %485 = vmatpush.bf16.xpose.msra.mxu0 %v479
      %486 = vmatpush.bf16.xpose.msra.mxu0 %v476
      %487 = vmatpush.bf16.xpose.msra.mxu0 %v473
      %488 = vmatpush.bf16.xpose.msra.mxu0 %v470
      %489 = vmatpush.bf16.xpose.msra.mxu0 %v467
      %490 = vmatpush.bf16.xpose.msra.mxu0 %v464
      %491 = vmatpush.bf16.xpose.msra.mxu0 %v461
      %492 = vmatmul.bf16.gmra.mxu0 %v449
      %v493 = vpop.f32.mrf.mxu0
      %v494 = vadd.f32 0.0, %v493
      %v495 = vpop.f32.mrf.mxu0
      %v496 = vadd.f32 0.0, %v495
      %497 = vmatmul.bf16.gmra.mxu0 %v452
      %v498 = vpop.f32.mrf.mxu0
      %v499 = vadd.f32 0.0, %v498
      %v500 = vpop.f32.mrf.mxu0
      %v501 = vadd.f32 0.0, %v500
      %502 = vmatmul.bf16.gmra.mxu0 %v455
      %v503 = vpop.f32.mrf.mxu0
      %v504 = vadd.f32 0.0, %v503
      %v505 = vpop.f32.mrf.mxu0
      %v506 = vadd.f32 0.0, %v505
      %507 = vmatmul.bf16.gmra.mxu0 %v458
      %v508 = vpop.f32.mrf.mxu0
      %v509 = vadd.f32 0.0, %v508
      %v510 = vpop.f32.mrf.mxu0
      %v511 = vadd.f32 0.0, %v510
      %512 = vdwg.mxu0
      %v513 = vlaneseq
      %v514 = vshrl.u32 %v513, 7
      %v515 = vadd.s32 %v514, 8
      %v516 = vadd.s32 %v514, 16
      %v517 = vadd.s32 %v514, 24
      %v518 = vadd.s32 %v514, 32
      %v519 = vadd.s32 %v514, 40
      %v520 = vadd.s32 %v514, 48
      %v521 = vadd.s32 %v514, 56
      %s522 = smul.u32 %s21, 64
      %v523 = vstv %s522
      %v524 = vadd.s32 %v514, %v523
      %v525 = vadd.s32 %v515, %v523
      %v526 = vadd.s32 %v516, %v523
      %v527 = vadd.s32 %v517, %v523
      %v528 = vadd.s32 %v518, %v523
      %v529 = vadd.s32 %v519, %v523
      %v530 = vadd.s32 %v520, %v523
      %v531 = vadd.s32 %v521, %v523
      %v532 = vlaneseq
      %v533 = vand.u32 %v532, 127
      %s534 = smul.u32 %s22, 128
      %v535 = vstv %s534
      %v536 = vadd.s32 %v533, %v535
      %vm537 = vcmp.ne.s32.totalorder %v524, %v536
      %vm538 = vcmp.ne.s32.totalorder %v525, %v536
      %vm539 = vcmp.ne.s32.totalorder %v526, %v536
      %vm540 = vcmp.ne.s32.totalorder %v527, %v536
      %vm541 = vcmp.ne.s32.totalorder %v528, %v536
      %vm542 = vcmp.ne.s32.totalorder %v529, %v536
      %vm543 = vcmp.ne.s32.totalorder %v530, %v536
      %vm544 = vcmp.ne.s32.totalorder %v531, %v536
      %vm545 = vcmp.lt.s32.totalorder %v536, 16
      %v546 = vsel %vm545, 1, 0
      %vm547 = vcmp.eq.s32.totalorder %v546, 1
      %v548 = vsel %vm547, %v494, -inf
      %v549 = vsel %vm547, %v496, -inf
      %v550 = vsel %vm547, %v499, -inf
      %v551 = vsel %vm547, %v501, -inf
      %v552 = vsel %vm547, %v504, -inf
      %v553 = vsel %vm547, %v506, -inf
      %v554 = vsel %vm547, %v509, -inf
      %v555 = vsel %vm547, %v511, -inf
      %v556 = vld [vmem:[#allocation2] sm:$0xff]
      %v557 = vld [vmem:[#allocation2 + $0x8] sm:$0xff]
      %v558 = vld [vmem:[#allocation2 + $0x10] sm:$0xff]
      %v559 = vld [vmem:[#allocation2 + $0x18] sm:$0xff]
      %v560 = vld [vmem:[#allocation2 + $0x20] sm:$0xff]
      %v561 = vld [vmem:[#allocation2 + $0x28] sm:$0xff]
      %v562 = vld [vmem:[#allocation2 + $0x30] sm:$0xff]
      %v563 = vld [vmem:[#allocation2 + $0x38] sm:$0xff]
      %564 = vmax.xlane.f32.xlu0 %v548
      %v565 = vpop.xlane.xlu0 %564
      %566 = vmax.xlane.f32.xlu0 %v549
      %v567 = vpop.xlane.xlu0 %566
      %568 = vmax.xlane.f32.xlu0 %v550
      %v569 = vpop.xlane.xlu0 %568
      %570 = vmax.xlane.f32.xlu0 %v551
      %v571 = vpop.xlane.xlu0 %570
      %572 = vmax.xlane.f32.xlu0 %v552
      %v573 = vpop.xlane.xlu0 %572
      %574 = vmax.xlane.f32.xlu0 %v553
      %v575 = vpop.xlane.xlu0 %574
      %576 = vmax.xlane.f32.xlu0 %v554
      %v577 = vpop.xlane.xlu0 %576
      %578 = vmax.xlane.f32.xlu0 %v555
      %v579 = vpop.xlane.xlu0 %578
      %v580 = vmax.f32 %v556, %v565
      %v581 = vmax.f32 %v557, %v567
      %v582 = vmax.f32 %v558, %v569
      %v583 = vmax.f32 %v559, %v571
      %v584 = vmax.f32 %v560, %v573
      %v585 = vmax.f32 %v561, %v575
      %v586 = vmax.f32 %v562, %v577
      %v587 = vmax.f32 %v563, %v579
      %v588 = vsub.f32 %v556, %v580
      %v589 = vsub.f32 %v557, %v581
      %v590 = vsub.f32 %v558, %v582
      %v591 = vsub.f32 %v559, %v583
      %v592 = vsub.f32 %v560, %v584
      %v593 = vsub.f32 %v561, %v585
      %v594 = vsub.f32 %v562, %v586
      %v595 = vsub.f32 %v563, %v587
      %v596 = vmul.f32 %v588, 1.442695
      %v597 = vpow.pop %v596
      %v598 = vmul.f32 %v589, 1.442695
      %v599 = vpow.pop %v598
      %v600 = vmul.f32 %v590, 1.442695
      %v601 = vpow.pop %v600
      %v602 = vmul.f32 %v591, 1.442695
      %v603 = vpow.pop %v602
      %v604 = vmul.f32 %v592, 1.442695
      %v605 = vpow.pop %v604
      %v606 = vmul.f32 %v593, 1.442695
      %v607 = vpow.pop %v606
      %v608 = vmul.f32 %v594, 1.442695
      %v609 = vpow.pop %v608
      %v610 = vmul.f32 %v595, 1.442695
      %v611 = vpow.pop %v610
      %613 = vset.pattern.permute.xlu0 0
      %614 = vperm.xlu0 %613, %v580
      %v615 = vpop.permute.xlu0 %614
      %618 = vset.pattern.permute.xlu0 0
      %619 = vperm.xlu0 %618, %v581
      %v620 = vpop.permute.xlu0 %619
      %623 = vset.pattern.permute.xlu0 0
      %624 = vperm.xlu0 %623, %v582
      %v625 = vpop.permute.xlu0 %624
      %628 = vset.pattern.permute.xlu0 0
      %629 = vperm.xlu0 %628, %v583
      %v630 = vpop.permute.xlu0 %629
      %633 = vset.pattern.permute.xlu0 0
      %634 = vperm.xlu0 %633, %v584
      %v635 = vpop.permute.xlu0 %634
      %638 = vset.pattern.permute.xlu0 0
      %639 = vperm.xlu0 %638, %v585
      %v640 = vpop.permute.xlu0 %639
      %643 = vset.pattern.permute.xlu0 0
      %644 = vperm.xlu0 %643, %v586
      %v645 = vpop.permute.xlu0 %644
      %648 = vset.pattern.permute.xlu0 0
      %649 = vperm.xlu0 %648, %v587
      %v650 = vpop.permute.xlu0 %649
      %v652 = vsub.f32 %v548, %v615
      %v653 = vsub.f32 %v549, %v620
      %v654 = vsub.f32 %v550, %v625
      %v655 = vsub.f32 %v551, %v630
      %v656 = vsub.f32 %v552, %v635
      %v657 = vsub.f32 %v553, %v640
      %v658 = vsub.f32 %v554, %v645
      %v659 = vsub.f32 %v555, %v650
      %v660 = vmul.f32 %v652, 1.442695
      %v661 = vpow.pop %v660
      %v662 = vmul.f32 %v653, 1.442695
      %v663 = vpow.pop %v662
      %v664 = vmul.f32 %v654, 1.442695
      %v665 = vpow.pop %v664
      %v666 = vmul.f32 %v655, 1.442695
      %v667 = vpow.pop %v666
      %v668 = vmul.f32 %v656, 1.442695
      %v669 = vpow.pop %v668
      %v670 = vmul.f32 %v657, 1.442695
      %v671 = vpow.pop %v670
      %v672 = vmul.f32 %v658, 1.442695
      %v673 = vpow.pop %v672
      %v674 = vmul.f32 %v659, 1.442695
      %v675 = vpow.pop %v674
      %v676 = vsel %vm537, %v661, 0.0
      %v677 = vsel %vm538, %v663, 0.0
      %v678 = vsel %vm539, %v665, 0.0
      %v679 = vsel %vm540, %v667, 0.0
      %v680 = vsel %vm541, %v669, 0.0
      %v681 = vsel %vm542, %v671, 0.0
      %v682 = vsel %vm543, %v673, 0.0
      %v683 = vsel %vm544, %v675, 0.0
      %v684 = vld [vmem:[%s290] sm:$0xff]
      %v685 = vld [vmem:[%s290 + $0x8] sm:$0xff]
      %v686 = vld [vmem:[%s290 + $0x10] sm:$0xff]
      %v687 = vld [vmem:[%s290 + $0x18] sm:$0xff]
      %v688 = vld [vmem:[%s290 + $0x20] sm:$0xff]
      %v689 = vld [vmem:[%s290 + $0x28] sm:$0xff]
      %v690 = vld [vmem:[%s290 + $0x30] sm:$0xff]
      %v691 = vld [vmem:[%s290 + $0x38] sm:$0xff]
      %v692 = vld [vmem:[%s295] sm:$0x1]
      %693 = vset.pattern.permute.xlu0 0
      %694 = vperm.xlu0 %693, %v684
      %v695 = vpop.permute.xlu0 %694
      %696 = vset.pattern.permute.xlu0 0
      %697 = vperm.xlu0 %696, %v685
      %v698 = vpop.permute.xlu0 %697
      %699 = vset.pattern.permute.xlu0 0
      %700 = vperm.xlu0 %699, %v686
      %v701 = vpop.permute.xlu0 %700
      %702 = vset.pattern.permute.xlu0 0
      %703 = vperm.xlu0 %702, %v687
      %v704 = vpop.permute.xlu0 %703
      %705 = vset.pattern.permute.xlu0 0
      %706 = vperm.xlu0 %705, %v688
      %v707 = vpop.permute.xlu0 %706
      %708 = vset.pattern.permute.xlu0 0
      %709 = vperm.xlu0 %708, %v689
      %v710 = vpop.permute.xlu0 %709
      %711 = vset.pattern.permute.xlu0 0
      %712 = vperm.xlu0 %711, %v690
      %v713 = vpop.permute.xlu0 %712
      %714 = vset.pattern.permute.xlu0 0
      %715 = vperm.xlu0 %714, %v691
      %v716 = vpop.permute.xlu0 %715
      %v717 = vperm.slane %v692, 0
      %vm718 = vcmp.eq.s32.totalorder %v695, %v717
      %vm719 = vcmp.eq.s32.totalorder %v698, %v717
      %vm720 = vcmp.eq.s32.totalorder %v701, %v717
      %vm721 = vcmp.eq.s32.totalorder %v704, %v717
      %vm722 = vcmp.eq.s32.totalorder %v707, %v717
      %vm723 = vcmp.eq.s32.totalorder %v710, %v717
      %vm724 = vcmp.eq.s32.totalorder %v713, %v717
      %vm725 = vcmp.eq.s32.totalorder %v716, %v717
      %v726 = vld [vmem:[%s295 + $0x1] sm:$0x1]
      %727 = vset.pattern.permute.xlu0 1
      %728 = vperm.xlu0 %727, %v684
      %v729 = vpop.permute.xlu0 %728
      %730 = vset.pattern.permute.xlu0 1
      %731 = vperm.xlu0 %730, %v685
      %v732 = vpop.permute.xlu0 %731
      %733 = vset.pattern.permute.xlu0 1
      %734 = vperm.xlu0 %733, %v686
      %v735 = vpop.permute.xlu0 %734
      %736 = vset.pattern.permute.xlu0 1
      %737 = vperm.xlu0 %736, %v687
      %v738 = vpop.permute.xlu0 %737
      %739 = vset.pattern.permute.xlu0 1
      %740 = vperm.xlu0 %739, %v688
      %v741 = vpop.permute.xlu0 %740
      %742 = vset.pattern.permute.xlu0 1
      %743 = vperm.xlu0 %742, %v689
      %v744 = vpop.permute.xlu0 %743
      %745 = vset.pattern.permute.xlu0 1
      %746 = vperm.xlu0 %745, %v690
      %v747 = vpop.permute.xlu0 %746
      %748 = vset.pattern.permute.xlu0 1
      %749 = vperm.xlu0 %748, %v691
      %v750 = vpop.permute.xlu0 %749
      %v751 = vperm.slane %v726, 0
      %vm752 = vcmp.eq.s32.totalorder %v729, %v751
      %vm753 = vcmp.eq.s32.totalorder %v732, %v751
      %vm754 = vcmp.eq.s32.totalorder %v735, %v751
      %vm755 = vcmp.eq.s32.totalorder %v738, %v751
      %vm756 = vcmp.eq.s32.totalorder %v741, %v751
      %vm757 = vcmp.eq.s32.totalorder %v744, %v751
      %vm758 = vcmp.eq.s32.totalorder %v747, %v751
      %vm759 = vcmp.eq.s32.totalorder %v750, %v751
      %v760 = vld [vmem:[#allocation3] sm:$0xff]
      %v761 = vld [vmem:[#allocation3 + $0x8] sm:$0xff]
      %v762 = vld [vmem:[#allocation3 + $0x10] sm:$0xff]
      %v763 = vld [vmem:[#allocation3 + $0x18] sm:$0xff]
      %v764 = vld [vmem:[#allocation3 + $0x20] sm:$0xff]
      %v765 = vld [vmem:[#allocation3 + $0x28] sm:$0xff]
      %v766 = vld [vmem:[#allocation3 + $0x30] sm:$0xff]
      %v767 = vld [vmem:[#allocation3 + $0x38] sm:$0xff]
      %v768 = vmul.f32 %v597, %v760
      %v769 = vmul.f32 %v599, %v761
      %v770 = vmul.f32 %v601, %v762
      %v771 = vmul.f32 %v603, %v763
      %v772 = vmul.f32 %v605, %v764
      %v773 = vmul.f32 %v607, %v765
      %v774 = vmul.f32 %v609, %v766
      %v775 = vmul.f32 %v611, %v767
      %v776 = vsel %vm752, %v676, 0.0
      %v777 = vsel %vm753, %v677, 0.0
      %v778 = vsel %vm754, %v678, 0.0
      %v779 = vsel %vm755, %v679, 0.0
      %v780 = vsel %vm756, %v680, 0.0
      %v781 = vsel %vm757, %v681, 0.0
      %v782 = vsel %vm758, %v682, 0.0
      %v783 = vsel %vm759, %v683, 0.0
      %784 = vadd.xlane.f32.xlu0 %v776
      %v785 = vpop.xlane.xlu0 %784
      %786 = vadd.xlane.f32.xlu0 %v777
      %v787 = vpop.xlane.xlu0 %786
      %788 = vadd.xlane.f32.xlu0 %v778
      %v789 = vpop.xlane.xlu0 %788
      %790 = vadd.xlane.f32.xlu0 %v779
      %v791 = vpop.xlane.xlu0 %790
      %792 = vadd.xlane.f32.xlu0 %v780
      %v793 = vpop.xlane.xlu0 %792
      %794 = vadd.xlane.f32.xlu0 %v781
      %v795 = vpop.xlane.xlu0 %794
      %796 = vadd.xlane.f32.xlu0 %v782
      %v797 = vpop.xlane.xlu0 %796
      %798 = vadd.xlane.f32.xlu0 %v783
      %v799 = vpop.xlane.xlu0 %798
      %v800 = vadd.f32 %v768, %v785
      %v801 = vadd.f32 %v769, %v787
      %v802 = vadd.f32 %v770, %v789
      %v803 = vadd.f32 %v771, %v791
      %v804 = vadd.f32 %v772, %v793
      %v805 = vadd.f32 %v773, %v795
      %v806 = vadd.f32 %v774, %v797
      %v807 = vadd.f32 %v775, %v799
      %vm808 = vcmask 7168
      %809 = vst.msk [vmem:[#allocation3] sm:$0xff] %vm808, %v800
      %810 = vst.msk [vmem:[#allocation3 + $0x8] sm:$0xff] %vm808, %v801
      %811 = vst.msk [vmem:[#allocation3 + $0x10] sm:$0xff] %vm808, %v802
      %812 = vst.msk [vmem:[#allocation3 + $0x18] sm:$0xff] %vm808, %v803
      %813 = vst.msk [vmem:[#allocation3 + $0x20] sm:$0xff] %vm808, %v804
      %814 = vst.msk [vmem:[#allocation3 + $0x28] sm:$0xff] %vm808, %v805
      %815 = vst.msk [vmem:[#allocation3 + $0x30] sm:$0xff] %vm808, %v806
      %816 = vst.msk [vmem:[#allocation3 + $0x38] sm:$0xff] %vm808, %v807
      %v817 = vld [vmem:[#allocation4] sm:$0xff]
      %v818 = vld [vmem:[#allocation4 + $0x8] sm:$0xff]
      %v819 = vld [vmem:[#allocation4 + $0x10] sm:$0xff]
      %v820 = vld [vmem:[#allocation4 + $0x18] sm:$0xff]
      %v821 = vld [vmem:[#allocation4 + $0x20] sm:$0xff]
      %v822 = vld [vmem:[#allocation4 + $0x28] sm:$0xff]
      %v823 = vld [vmem:[#allocation4 + $0x30] sm:$0xff]
      %v824 = vld [vmem:[#allocation4 + $0x38] sm:$0xff]
      %v825 = vmul.f32 %v597, %v817
      %v826 = vmul.f32 %v599, %v818
      %v827 = vmul.f32 %v601, %v819
      %v828 = vmul.f32 %v603, %v820
      %v829 = vmul.f32 %v605, %v821
      %v830 = vmul.f32 %v607, %v822
      %v831 = vmul.f32 %v609, %v823
      %v832 = vmul.f32 %v611, %v824
      %v833 = vsel %vm752, 0.0, %v676
      %v834 = vsel %vm753, 0.0, %v677
      %v835 = vsel %vm754, 0.0, %v678
      %v836 = vsel %vm755, 0.0, %v679
      %v837 = vsel %vm756, 0.0, %v680
      %v838 = vsel %vm757, 0.0, %v681
      %v839 = vsel %vm758, 0.0, %v682
      %v840 = vsel %vm759, 0.0, %v683
      %841 = vadd.xlane.f32.xlu0 %v833
      %v842 = vpop.xlane.xlu0 %841
      %843 = vadd.xlane.f32.xlu0 %v834
      %v844 = vpop.xlane.xlu0 %843
      %845 = vadd.xlane.f32.xlu0 %v835
      %v846 = vpop.xlane.xlu0 %845
      %847 = vadd.xlane.f32.xlu0 %v836
      %v848 = vpop.xlane.xlu0 %847
      %849 = vadd.xlane.f32.xlu0 %v837
      %v850 = vpop.xlane.xlu0 %849
      %851 = vadd.xlane.f32.xlu0 %v838
      %v852 = vpop.xlane.xlu0 %851
      %853 = vadd.xlane.f32.xlu0 %v839
      %v854 = vpop.xlane.xlu0 %853
      %855 = vadd.xlane.f32.xlu0 %v840
      %v856 = vpop.xlane.xlu0 %855
      %v857 = vadd.f32 %v825, %v842
      %v858 = vadd.f32 %v826, %v844
      %v859 = vadd.f32 %v827, %v846
      %v860 = vadd.f32 %v828, %v848
      %v861 = vadd.f32 %v829, %v850
      %v862 = vadd.f32 %v830, %v852
      %v863 = vadd.f32 %v831, %v854
      %v864 = vadd.f32 %v832, %v856
      %865 = vst.msk [vmem:[#allocation4] sm:$0xff] %vm808, %v857
      %866 = vst.msk [vmem:[#allocation4 + $0x8] sm:$0xff] %vm808, %v858
      %867 = vst.msk [vmem:[#allocation4 + $0x10] sm:$0xff] %vm808, %v859
      %868 = vst.msk [vmem:[#allocation4 + $0x18] sm:$0xff] %vm808, %v860
      %869 = vst.msk [vmem:[#allocation4 + $0x20] sm:$0xff] %vm808, %v861
      %870 = vst.msk [vmem:[#allocation4 + $0x28] sm:$0xff] %vm808, %v862
      %871 = vst.msk [vmem:[#allocation4 + $0x30] sm:$0xff] %vm808, %v863
      %872 = vst.msk [vmem:[#allocation4 + $0x38] sm:$0xff] %vm808, %v864
      %vm873 = vmand %vm718, %vm537
      %vm874 = vmand %vm719, %vm538
      %vm875 = vmand %vm720, %vm539
      %vm876 = vmand %vm721, %vm540
      %vm877 = vmand %vm722, %vm541
      %vm878 = vmand %vm723, %vm542
      %vm879 = vmand %vm724, %vm543
      %vm880 = vmand %vm725, %vm544
      %v881 = vld [vmem:[#allocation6] sm:$0xff]
      %v882 = vld [vmem:[#allocation6 + $0x8] sm:$0xff]
      %v883 = vld [vmem:[#allocation6 + $0x10] sm:$0xff]
      %v884 = vld [vmem:[#allocation6 + $0x18] sm:$0xff]
      %v885 = vld [vmem:[#allocation6 + $0x20] sm:$0xff]
      %v886 = vld [vmem:[#allocation6 + $0x28] sm:$0xff]
      %v887 = vld [vmem:[#allocation6 + $0x30] sm:$0xff]
      %v888 = vld [vmem:[#allocation6 + $0x38] sm:$0xff]
      %v889 = vsel %vm873, 1.0, 0.0
      %v890 = vsel %vm874, 1.0, 0.0
      %v891 = vsel %vm875, 1.0, 0.0
      %v892 = vsel %vm876, 1.0, 0.0
      %v893 = vsel %vm877, 1.0, 0.0
      %v894 = vsel %vm878, 1.0, 0.0
      %v895 = vsel %vm879, 1.0, 0.0
      %v896 = vsel %vm880, 1.0, 0.0
      %897 = vadd.xlane.f32.xlu0 %v889
      %v898 = vpop.xlane.xlu0 %897
      %899 = vadd.xlane.f32.xlu0 %v890
      %v900 = vpop.xlane.xlu0 %899
      %901 = vadd.xlane.f32.xlu0 %v891
      %v902 = vpop.xlane.xlu0 %901
      %903 = vadd.xlane.f32.xlu0 %v892
      %v904 = vpop.xlane.xlu0 %903
      %905 = vadd.xlane.f32.xlu0 %v893
      %v906 = vpop.xlane.xlu0 %905
      %907 = vadd.xlane.f32.xlu0 %v894
      %v908 = vpop.xlane.xlu0 %907
      %909 = vadd.xlane.f32.xlu0 %v895
      %v910 = vpop.xlane.xlu0 %909
      %911 = vadd.xlane.f32.xlu0 %v896
      %v912 = vpop.xlane.xlu0 %911
      %v913 = vadd.f32 %v881, %v898
      %v914 = vadd.f32 %v882, %v900
      %v915 = vadd.f32 %v883, %v902
      %v916 = vadd.f32 %v884, %v904
      %v917 = vadd.f32 %v885, %v906
      %v918 = vadd.f32 %v886, %v908
      %v919 = vadd.f32 %v887, %v910
      %v920 = vadd.f32 %v888, %v912
      %921 = vst.msk [vmem:[#allocation6] sm:$0xff] %vm808, %v913
      %922 = vst.msk [vmem:[#allocation6 + $0x8] sm:$0xff] %vm808, %v914
      %923 = vst.msk [vmem:[#allocation6 + $0x10] sm:$0xff] %vm808, %v915
      %924 = vst.msk [vmem:[#allocation6 + $0x18] sm:$0xff] %vm808, %v916
      %925 = vst.msk [vmem:[#allocation6 + $0x20] sm:$0xff] %vm808, %v917
      %926 = vst.msk [vmem:[#allocation6 + $0x28] sm:$0xff] %vm808, %v918
      %927 = vst.msk [vmem:[#allocation6 + $0x30] sm:$0xff] %vm808, %v919
      %928 = vst.msk [vmem:[#allocation6 + $0x38] sm:$0xff] %vm808, %v920
      %v929 = vld [vmem:[#allocation5] sm:$0xff]
      %v930 = vld [vmem:[#allocation5 + $0x8] sm:$0xff]
      %v931 = vld [vmem:[#allocation5 + $0x10] sm:$0xff]
      %v932 = vld [vmem:[#allocation5 + $0x18] sm:$0xff]
      %v933 = vld [vmem:[#allocation5 + $0x20] sm:$0xff]
      %v934 = vld [vmem:[#allocation5 + $0x28] sm:$0xff]
      %v935 = vld [vmem:[#allocation5 + $0x30] sm:$0xff]
      %v936 = vld [vmem:[#allocation5 + $0x38] sm:$0xff]
      %v937 = vsel %vm873, %v548, 0.0
      %v938 = vsel %vm874, %v549, 0.0
      %v939 = vsel %vm875, %v550, 0.0
      %v940 = vsel %vm876, %v551, 0.0
      %v941 = vsel %vm877, %v552, 0.0
      %v942 = vsel %vm878, %v553, 0.0
      %v943 = vsel %vm879, %v554, 0.0
      %v944 = vsel %vm880, %v555, 0.0
      %945 = vadd.xlane.f32.xlu0 %v937
      %v946 = vpop.xlane.xlu0 %945
      %947 = vadd.xlane.f32.xlu0 %v938
      %v948 = vpop.xlane.xlu0 %947
      %949 = vadd.xlane.f32.xlu0 %v939
      %v950 = vpop.xlane.xlu0 %949
      %951 = vadd.xlane.f32.xlu0 %v940
      %v952 = vpop.xlane.xlu0 %951
      %953 = vadd.xlane.f32.xlu0 %v941
      %v954 = vpop.xlane.xlu0 %953
      %955 = vadd.xlane.f32.xlu0 %v942
      %v956 = vpop.xlane.xlu0 %955
      %957 = vadd.xlane.f32.xlu0 %v943
      %v958 = vpop.xlane.xlu0 %957
      %959 = vadd.xlane.f32.xlu0 %v944
      %v960 = vpop.xlane.xlu0 %959
      %v961 = vadd.f32 %v929, %v946
      %v962 = vadd.f32 %v930, %v948
      %v963 = vadd.f32 %v931, %v950
      %v964 = vadd.f32 %v932, %v952
      %v965 = vadd.f32 %v933, %v954
      %v966 = vadd.f32 %v934, %v956
      %v967 = vadd.f32 %v935, %v958
      %v968 = vadd.f32 %v936, %v960
      %969 = vst.msk [vmem:[#allocation5] sm:$0xff] %vm808, %v961
      %970 = vst.msk [vmem:[#allocation5 + $0x8] sm:$0xff] %vm808, %v962
      %971 = vst.msk [vmem:[#allocation5 + $0x10] sm:$0xff] %vm808, %v963
      %972 = vst.msk [vmem:[#allocation5 + $0x18] sm:$0xff] %vm808, %v964
      %973 = vst.msk [vmem:[#allocation5 + $0x20] sm:$0xff] %vm808, %v965
      %974 = vst.msk [vmem:[#allocation5 + $0x28] sm:$0xff] %vm808, %v966
      %975 = vst.msk [vmem:[#allocation5 + $0x30] sm:$0xff] %vm808, %v967
      %976 = vst.msk [vmem:[#allocation5 + $0x38] sm:$0xff] %vm808, %v968
      %977 = vst.msk [vmem:[#allocation2] sm:$0xff] %vm808, %v580
      %978 = vst.msk [vmem:[#allocation2 + $0x8] sm:$0xff] %vm808, %v581
      %979 = vst.msk [vmem:[#allocation2 + $0x10] sm:$0xff] %vm808, %v582
      %980 = vst.msk [vmem:[#allocation2 + $0x18] sm:$0xff] %vm808, %v583
      %981 = vst.msk [vmem:[#allocation2 + $0x20] sm:$0xff] %vm808, %v584
      %982 = vst.msk [vmem:[#allocation2 + $0x28] sm:$0xff] %vm808, %v585
      %983 = vst.msk [vmem:[#allocation2 + $0x30] sm:$0xff] %vm808, %v586
      %984 = vst.msk [vmem:[#allocation2 + $0x38] sm:$0xff] %vm808, %v587
      // Predicated region
      $region45: #{tpu_custom_call.1} parent=39 // pred_check
        %p985 = pneg %p302
      $region46: #{tpu_custom_call.1} parent=39 // pred_check_branch
        %987 = sbr.rel (%p985) target = $region48
      $region47: #{tpu_custom_call.1} parent=39 // pred_region
        %v988 = vld [vmem:[#allocation3] sm:$0xff]
        %v989 = vld [vmem:[#allocation3 + $0x8] sm:$0xff]
        %v990 = vld [vmem:[#allocation3 + $0x10] sm:$0xff]
        %v991 = vld [vmem:[#allocation3 + $0x18] sm:$0xff]
        %v992 = vld [vmem:[#allocation3 + $0x20] sm:$0xff]
        %v993 = vld [vmem:[#allocation3 + $0x28] sm:$0xff]
        %v994 = vld [vmem:[#allocation3 + $0x30] sm:$0xff]
        %v995 = vld [vmem:[#allocation3 + $0x38] sm:$0xff]
        %v996 = vlog2.pop %v988
        %v997 = vmul.f32 %v996, 0.6931472
        %v998 = vlog2.pop %v989
        %v999 = vmul.f32 %v998, 0.6931472
        %v1000 = vlog2.pop %v990
        %v1001 = vmul.f32 %v1000, 0.6931472
        %v1002 = vlog2.pop %v991
        %v1003 = vmul.f32 %v1002, 0.6931472
        %v1004 = vlog2.pop %v992
        %v1005 = vmul.f32 %v1004, 0.6931472
        %v1006 = vlog2.pop %v993
        %v1007 = vmul.f32 %v1006, 0.6931472
        %v1008 = vlog2.pop %v994
        %v1009 = vmul.f32 %v1008, 0.6931472
        %v1010 = vlog2.pop %v995
        %v1011 = vmul.f32 %v1010, 0.6931472
        %v1012 = vmul.f32 %v997, 0.6
        %v1013 = vmul.f32 %v999, 0.6
        %v1014 = vmul.f32 %v1001, 0.6
        %v1015 = vmul.f32 %v1003, 0.6
        %v1016 = vmul.f32 %v1005, 0.6
        %v1017 = vmul.f32 %v1007, 0.6
        %v1018 = vmul.f32 %v1009, 0.6
        %v1019 = vmul.f32 %v1011, 0.6
        %v1020 = vld [vmem:[#allocation4] sm:$0xff]
        %v1021 = vld [vmem:[#allocation4 + $0x8] sm:$0xff]
        %v1022 = vld [vmem:[#allocation4 + $0x10] sm:$0xff]
        %v1023 = vld [vmem:[#allocation4 + $0x18] sm:$0xff]
        %v1024 = vld [vmem:[#allocation4 + $0x20] sm:$0xff]
        %v1025 = vld [vmem:[#allocation4 + $0x28] sm:$0xff]
        %v1026 = vld [vmem:[#allocation4 + $0x30] sm:$0xff]
        %v1027 = vld [vmem:[#allocation4 + $0x38] sm:$0xff]
        %v1028 = vlog2.pop %v1020
        %v1029 = vmul.f32 %v1028, 0.6931472
        %v1030 = vlog2.pop %v1021
        %v1031 = vmul.f32 %v1030, 0.6931472
        %v1032 = vlog2.pop %v1022
        %v1033 = vmul.f32 %v1032, 0.6931472
        %v1034 = vlog2.pop %v1023
        %v1035 = vmul.f32 %v1034, 0.6931472
        %v1036 = vlog2.pop %v1024
        %v1037 = vmul.f32 %v1036, 0.6931472
        %v1038 = vlog2.pop %v1025
        %v1039 = vmul.f32 %v1038, 0.6931472
        %v1040 = vlog2.pop %v1026
        %v1041 = vmul.f32 %v1040, 0.6931472
        %v1042 = vlog2.pop %v1027
        %v1043 = vmul.f32 %v1042, 0.6931472
        %v1044 = vmul.f32 %v1029, 0.4
        %v1045 = vmul.f32 %v1031, 0.4
        %v1046 = vmul.f32 %v1033, 0.4
        %v1047 = vmul.f32 %v1035, 0.4
        %v1048 = vmul.f32 %v1037, 0.4
        %v1049 = vmul.f32 %v1039, 0.4
        %v1050 = vmul.f32 %v1041, 0.4
        %v1051 = vmul.f32 %v1043, 0.4
        %v1052 = vadd.f32 %v1012, %v1044
        %v1053 = vadd.f32 %v1013, %v1045
        %v1054 = vadd.f32 %v1014, %v1046
        %v1055 = vadd.f32 %v1015, %v1047
        %v1056 = vadd.f32 %v1016, %v1048
        %v1057 = vadd.f32 %v1017, %v1049
        %v1058 = vadd.f32 %v1018, %v1050
        %v1059 = vadd.f32 %v1019, %v1051
        %v1060 = vld [vmem:[#allocation2] sm:$0xff]
        %v1061 = vld [vmem:[#allocation2 + $0x8] sm:$0xff]
        %v1062 = vld [vmem:[#allocation2 + $0x10] sm:$0xff]
        %v1063 = vld [vmem:[#allocation2 + $0x18] sm:$0xff]
        %v1064 = vld [vmem:[#allocation2 + $0x20] sm:$0xff]
        %v1065 = vld [vmem:[#allocation2 + $0x28] sm:$0xff]
        %v1066 = vld [vmem:[#allocation2 + $0x30] sm:$0xff]
        %v1067 = vld [vmem:[#allocation2 + $0x38] sm:$0xff]
        %v1068 = vadd.f32 %v1052, %v1060
        %v1069 = vadd.f32 %v1053, %v1061
        %v1070 = vadd.f32 %v1054, %v1062
        %v1071 = vadd.f32 %v1055, %v1063
        %v1072 = vadd.f32 %v1056, %v1064
        %v1073 = vadd.f32 %v1057, %v1065
        %v1074 = vadd.f32 %v1058, %v1066
        %v1075 = vadd.f32 %v1059, %v1067
        %v1076 = vld [vmem:[#allocation5] sm:$0xff]
        %v1077 = vld [vmem:[#allocation5 + $0x8] sm:$0xff]
        %v1078 = vld [vmem:[#allocation5 + $0x10] sm:$0xff]
        %v1079 = vld [vmem:[#allocation5 + $0x18] sm:$0xff]
        %v1080 = vld [vmem:[#allocation5 + $0x20] sm:$0xff]
        %v1081 = vld [vmem:[#allocation5 + $0x28] sm:$0xff]
        %v1082 = vld [vmem:[#allocation5 + $0x30] sm:$0xff]
        %v1083 = vld [vmem:[#allocation5 + $0x38] sm:$0xff]
        %v1084 = vld [vmem:[#allocation6] sm:$0xff]
        %v1085 = vld [vmem:[#allocation6 + $0x8] sm:$0xff]
        %v1086 = vld [vmem:[#allocation6 + $0x10] sm:$0xff]
        %v1087 = vld [vmem:[#allocation6 + $0x18] sm:$0xff]
        %v1088 = vld [vmem:[#allocation6 + $0x20] sm:$0xff]
        %v1089 = vld [vmem:[#allocation6 + $0x28] sm:$0xff]
        %v1090 = vld [vmem:[#allocation6 + $0x30] sm:$0xff]
        %v1091 = vld [vmem:[#allocation6 + $0x38] sm:$0xff]
        %v1092 = vrcp.pop %v1084
        %v1093 = vmul.f32 %v1084, %v1092
        %v1094 = vsub.f32 1.0, %v1093
        %v1095 = vmul.f32 %v1092, %v1094
        %v1096 = vadd.f32 %v1092, %v1095
        %vm1097 = vweird.f32 %v1084
        %vm1098 = vweird.f32 %v1092
        %vm1099 = vmor %vm1097, %vm1098
        %v1100 = vsel %vm1099, %v1092, %v1096
        %v1101 = vand.u32 2147483647, %v1084
        %vm1102 = vcmp.eq.f32.partialorder %v1101, 8.507059e+37
        %v1103 = vand.u32 %v1084, 2147483648
        %v1104 = vor.u32 1.1754944e-38, %v1103
        %v1105 = vsel %vm1102, %v1104, %v1100
        %v1106 = vmul.f32 %v1076, %v1105
        %v1107 = vrcp.pop %v1085
        %v1108 = vmul.f32 %v1085, %v1107
        %v1109 = vsub.f32 1.0, %v1108
        %v1110 = vmul.f32 %v1107, %v1109
        %v1111 = vadd.f32 %v1107, %v1110
        %vm1112 = vweird.f32 %v1085
        %vm1113 = vweird.f32 %v1107
        %vm1114 = vmor %vm1112, %vm1113
        %v1115 = vsel %vm1114, %v1107, %v1111
        %v1116 = vand.u32 2147483647, %v1085
        %vm1117 = vcmp.eq.f32.partialorder %v1116, 8.507059e+37
        %v1118 = vand.u32 %v1085, 2147483648
        %v1119 = vor.u32 1.1754944e-38, %v1118
        %v1120 = vsel %vm1117, %v1119, %v1115
        %v1121 = vmul.f32 %v1077, %v1120
        %v1122 = vrcp.pop %v1086
        %v1123 = vmul.f32 %v1086, %v1122
        %v1124 = vsub.f32 1.0, %v1123
        %v1125 = vmul.f32 %v1122, %v1124
        %v1126 = vadd.f32 %v1122, %v1125
        %vm1127 = vweird.f32 %v1086
        %vm1128 = vweird.f32 %v1122
        %vm1129 = vmor %vm1127, %vm1128
        %v1130 = vsel %vm1129, %v1122, %v1126
        %v1131 = vand.u32 2147483647, %v1086
        %vm1132 = vcmp.eq.f32.partialorder %v1131, 8.507059e+37
        %v1133 = vand.u32 %v1086, 2147483648
        %v1134 = vor.u32 1.1754944e-38, %v1133
        %v1135 = vsel %vm1132, %v1134, %v1130
        %v1136 = vmul.f32 %v1078, %v1135
        %v1137 = vrcp.pop %v1087
        %v1138 = vmul.f32 %v1087, %v1137
        %v1139 = vsub.f32 1.0, %v1138
        %v1140 = vmul.f32 %v1137, %v1139
        %v1141 = vadd.f32 %v1137, %v1140
        %vm1142 = vweird.f32 %v1087
        %vm1143 = vweird.f32 %v1137
        %vm1144 = vmor %vm1142, %vm1143
        %v1145 = vsel %vm1144, %v1137, %v1141
        %v1146 = vand.u32 2147483647, %v1087
        %vm1147 = vcmp.eq.f32.partialorder %v1146, 8.507059e+37
        %v1148 = vand.u32 %v1087, 2147483648
        %v1149 = vor.u32 1.1754944e-38, %v1148
        %v1150 = vsel %vm1147, %v1149, %v1145
        %v1151 = vmul.f32 %v1079, %v1150
        %v1152 = vrcp.pop %v1088
        %v1153 = vmul.f32 %v1088, %v1152
        %v1154 = vsub.f32 1.0, %v1153
        %v1155 = vmul.f32 %v1152, %v1154
        %v1156 = vadd.f32 %v1152, %v1155
        %vm1157 = vweird.f32 %v1088
        %vm1158 = vweird.f32 %v1152
        %vm1159 = vmor %vm1157, %vm1158
        %v1160 = vsel %vm1159, %v1152, %v1156
        %v1161 = vand.u32 2147483647, %v1088
        %vm1162 = vcmp.eq.f32.partialorder %v1161, 8.507059e+37
        %v1163 = vand.u32 %v1088, 2147483648
        %v1164 = vor.u32 1.1754944e-38, %v1163
        %v1165 = vsel %vm1162, %v1164, %v1160
        %v1166 = vmul.f32 %v1080, %v1165
        %v1167 = vrcp.pop %v1089
        %v1168 = vmul.f32 %v1089, %v1167
        %v1169 = vsub.f32 1.0, %v1168
        %v1170 = vmul.f32 %v1167, %v1169
        %v1171 = vadd.f32 %v1167, %v1170
        %vm1172 = vweird.f32 %v1089
        %vm1173 = vweird.f32 %v1167
        %vm1174 = vmor %vm1172, %vm1173
        %v1175 = vsel %vm1174, %v1167, %v1171
        %v1176 = vand.u32 2147483647, %v1089
        %vm1177 = vcmp.eq.f32.partialorder %v1176, 8.507059e+37
        %v1178 = vand.u32 %v1089, 2147483648
        %v1179 = vor.u32 1.1754944e-38, %v1178
        %v1180 = vsel %vm1177, %v1179, %v1175
        %v1181 = vmul.f32 %v1081, %v1180
        %v1182 = vrcp.pop %v1090
        %v1183 = vmul.f32 %v1090, %v1182
        %v1184 = vsub.f32 1.0, %v1183
        %v1185 = vmul.f32 %v1182, %v1184
        %v1186 = vadd.f32 %v1182, %v1185
        %vm1187 = vweird.f32 %v1090
        %vm1188 = vweird.f32 %v1182
        %vm1189 = vmor %vm1187, %vm1188
        %v1190 = vsel %vm1189, %v1182, %v1186
        %v1191 = vand.u32 2147483647, %v1090
        %vm1192 = vcmp.eq.f32.partialorder %v1191, 8.507059e+37
        %v1193 = vand.u32 %v1090, 2147483648
        %v1194 = vor.u32 1.1754944e-38, %v1193
        %v1195 = vsel %vm1192, %v1194, %v1190
        %v1196 = vmul.f32 %v1082, %v1195
        %v1197 = vrcp.pop %v1091
        %v1198 = vmul.f32 %v1091, %v1197
        %v1199 = vsub.f32 1.0, %v1198
        %v1200 = vmul.f32 %v1197, %v1199
        %v1201 = vadd.f32 %v1197, %v1200
        %vm1202 = vweird.f32 %v1091
        %vm1203 = vweird.f32 %v1197
        %vm1204 = vmor %vm1202, %vm1203
        %v1205 = vsel %vm1204, %v1197, %v1201
        %v1206 = vand.u32 2147483647, %v1091
        %vm1207 = vcmp.eq.f32.partialorder %v1206, 8.507059e+37
        %v1208 = vand.u32 %v1091, 2147483648
        %v1209 = vor.u32 1.1754944e-38, %v1208
        %v1210 = vsel %vm1207, %v1209, %v1205
        %v1211 = vmul.f32 %v1083, %v1210
        %v1212 = vsub.f32 %v1068, %v1106
        %v1213 = vsub.f32 %v1069, %v1121
        %v1214 = vsub.f32 %v1070, %v1136
        %v1215 = vsub.f32 %v1071, %v1151
        %v1216 = vsub.f32 %v1072, %v1166
        %v1217 = vsub.f32 %v1073, %v1181
        %v1218 = vsub.f32 %v1074, %v1196
        %v1219 = vsub.f32 %v1075, %v1211
        %1220 = vst.msk [vmem:[%s300] sm:$0xff] %vm808, %v1212
        %1221 = vst.msk [vmem:[%s300 + $0x8] sm:$0xff] %vm808, %v1213
        %1222 = vst.msk [vmem:[%s300 + $0x10] sm:$0xff] %vm808, %v1214
        %1223 = vst.msk [vmem:[%s300 + $0x18] sm:$0xff] %vm808, %v1215
        %1224 = vst.msk [vmem:[%s300 + $0x20] sm:$0xff] %vm808, %v1216
        %1225 = vst.msk [vmem:[%s300 + $0x28] sm:$0xff] %vm808, %v1217
        %1226 = vst.msk [vmem:[%s300 + $0x30] sm:$0xff] %vm808, %v1218
        %1227 = vst.msk [vmem:[%s300 + $0x38] sm:$0xff] %vm808, %v1219
      $region48: #{tpu_custom_call.1} parent=39 // pred_fallthru
        _
      %s1228 = smul.u32 8, %s21
      %p1229 = scmp.lt.s32.totalorder %s1228, 15
      %s1230 = scalar_select %p1229, %s1228, 15
      %s1231 = smul.addr %s1230, 8
      %s1232 = scalar_lea.vmem %s5, %s1231
      // Predicated region
      $region49: #{tpu_custom_call.1} parent=39 // pred_check
        %p1233 = pneg %p172
      $region50: #{tpu_custom_call.1} parent=39 // pred_check_branch
        %1235 = sbr.rel (%p1233) target = $region52
      $region51: #{tpu_custom_call.1} parent=39 // pred_region
        %s1236 = smul.u32 8, %s21
      $region52: #{tpu_custom_call.1} parent=39 // pred_fallthru
        _
    $region40: #{tpu_custom_call.1} parent=5 // pred_fallthru
      _
    %p1237 = scmp.le.s32.totalorder 2, %s12
    // Predicated region
    $region53: #{tpu_custom_call.1} parent=5 // pred_check
      %p1238 = pneg %p1237
    $region54: #{tpu_custom_call.1} parent=5 // pred_check_branch
      %1240 = sbr.rel (%p1238) target = $region56
    $region55: #{tpu_custom_call.1} parent=5 // pred_region
      %s1241 = ssub.s32 %s12, 2
      // Predicated region
      $region57: #{tpu_custom_call.1} parent=55 // pred_check
        %p1242 = pneg %p178
      $region58: #{tpu_custom_call.1} parent=55 // pred_check_branch
        %1244 = sbr.rel (%p1242) target = $region60
      $region59: #{tpu_custom_call.1} parent=55 // pred_region
        %s1245 = smul.u32 8, %s23
        %p1246 = scmp.lt.s32.totalorder %s1245, 15
        %s1247 = scalar_select %p1246, %s1245, 15
        %s1248 = smul.addr %s1247, 8
        %s1249 = scalar_lea.vmem %s5, %s1248
      $region60: #{tpu_custom_call.1} parent=55 // pred_fallthru
        _
    $region56: #{tpu_custom_call.1} parent=5 // pred_fallthru
      _
  $region6: #{tpu_custom_call.1} parent=0 // loop_footer
    %s16 = sadd.s32 1, %s12
  $region7: #{tpu_custom_call.1} parent=0 // loop_footer_branch
    %11 = sbr.rel target = $region3
  $region8: #{tpu_custom_call.1} parent=0 // loop_exit
    _

</llo_original>
